<compile_context>
chip_gen: v5e
topology: v5e:2x2
jax: 0.10.0
libtpu: 0.0.40
codegen_flags: <defaults>
</compile_context>

<pallas_src>
import jax
import jax.numpy as jnp
from jax.experimental import pallas as pl
from jax.experimental.pallas import tpu as pltpu

NUM_FILTERS = (160, 160, 160, 320)
OUT_DIM = 128


# --------------------------------------------------------------------------
# Hardware detection & tile planning
# --------------------------------------------------------------------------
def _chip_info():
    """Return (vmem_bytes_per_tensorcore, is_two_core_chip)."""
    vmem = None
    try:
        vmem = int(pltpu.get_tpu_info().vmem_capacity_bytes)
    except Exception:
        vmem = None
    kind = ""
    try:
        kind = jax.devices()[0].device_kind.lower()
    except Exception:
        kind = ""
    two_cores = "v7" in kind                      # v7x: 2 TCs / chip
    if vmem is None:
        vmem = (64 if two_cores else 128) * 1024 * 1024
    return vmem, two_cores


def _divisors_desc(n, cap):
    return [d for d in range(min(n, cap), 0, -1) if n % d == 0]


def _plan(B, num_filters, hw_list, itemsizes, vmem_bytes, two_cores):
    """Pick (batch_block, spatial_chunk).  chunk is always a multiple of 128;
    a branch with hw <= chunk is kept fully resident (no chunking)."""
    act_budget = vmem_bytes // 2                  # double-buffered acts + accs
    bb_cap = 32 if two_cores else 64
    cands = _divisors_desc(B, bb_cap) or [1]
    if two_cores:
        # Prefer leaving >=2 batch blocks so the "parallel" axis feeds 2 TCs.
        pref = [d for d in cands if B // d >= 2]
        cands = pref + [d for d in cands if B // d < 2]

    max_hw = max(hw_list)
    chunk_cap = ((max_hw + 127) // 128) * 128
    target = min(1024, chunk_cap)                 # 512-1024 already ~85% of HBM roofline

    def working_set(bb, chunk):
        act = 0
        acc = 0
        for c, hw, isz in zip(num_filters, hw_list, itemsizes):
            act += 2 * bb * c * min(chunk, hw) * isz      # double-buffered tile
            if hw > chunk:                                 # chunked -> lane-dense acc
                acc += bb * c * 128 * 4
        return act + acc

    for bb in cands:
        if working_set(bb, target) <= act_budget:
            chunk = target
            while chunk < chunk_cap and working_set(bb, chunk + 128) <= act_budget:
                chunk += 128                      # grow chunk first (DMA row length)
            return bb, chunk
    # Fallback: tiny batch block, largest feasible chunk (>=128).
    bb = 1
    chunk = 128
    while chunk < chunk_cap and working_set(bb, chunk + 128) <= act_budget:
        chunk += 128
    return bb, chunk


# --------------------------------------------------------------------------
# Kernel
# --------------------------------------------------------------------------
def _make_kernel(num_filters, out_dim, hw_list, chunk_js, steps_js, n_steps):
    n_br = len(num_filters)
    chunked = [j for j in range(n_br) if steps_js[j] > 1]
    inv_hw = [1.0 / float(h) for h in hw_list]

    def kernel(*refs):
        x_refs = refs[:n_br]                     # (bb, C_j, chunk_j) per branch
        wb_refs = refs[n_br:3 * n_br]            # w0,b0,w1,b1,...
        wf_ref = refs[3 * n_br]                  # (1, n_br*out_dim)
        bf_ref = refs[3 * n_br + 1]              # (1, 1)
        out_ref = refs[3 * n_br + 2]             # (1, bb, 1)
        acc_refs = refs[3 * n_br + 3:]           # lane-dense (bb, C_j, 128) f32
        acc_of = {j: acc_refs[idx] for idx, j in enumerate(chunked)}

        k = pl.program_id(1)

        if chunked:
            @pl.when(k == 0)
            def _init():
                for j in chunked:
                    acc_of[j][...] = jnp.zeros_like(acc_of[j])

            # Hot loop: pure vld + VPU adds; cross-lane reduce is deferred to
            # the finalize step so XLU never sits on the streaming path.
            lane = jax.lax.broadcasted_iota(jnp.int32, (1, 1, 128), 2)  # hoisted
            for j in chunked:
                cj = chunk_js[j]
                n_slices = cj // 128
                needs_mask = (n_steps * cj > hw_list[j])   # tail / finished branch
                x = x_refs[j]
                partial = None
                for s in range(n_slices):
                    piece = x[:, :, s * 128:(s + 1) * 128].astype(jnp.float32)
                    if needs_mask:
                        limit = hw_list[j] - (k * cj + s * 128)
                        piece = jnp.where(lane < limit, piece, 0.0)
                    partial = piece if partial is None else partial + piece
                acc_of[j][...] += partial

        # Finalize: GAP scale + FC + ReLU per branch, fused final linear.
        @pl.when(k == n_steps - 1)
        def _finalize():
            bb = out_ref.shape[1]
            out = jnp.zeros((bb, 1), jnp.float32) + bf_ref[...]          # (bb, 1)
            for j in range(n_br):
                if j in acc_of:
                    pooled = jnp.sum(acc_of[j][...], axis=-1) * inv_hw[j]
                else:
                    # Fully VMEM-resident branch: its single block stays valid
                    # (constant index_map) until the last step.
                    pooled = jnp.sum(x_refs[j][...].astype(jnp.float32),
                                     axis=-1) * inv_hw[j]                # (bb, C_j)
                w = wb_refs[2 * j][...]                                  # (C_j, D)
                b = wb_refs[2 * j + 1][...]                              # (1, D)
                h = jnp.dot(pooled, w, preferred_element_type=jnp.float32) + b
                h = jnp.maximum(h, 0.0)                                  # (bb, D)
                # Final linear slice for this branch: VPU multiply + lane
                # reduction instead of an N=1 MXU matmul.
                wf_j = wf_ref[:, j * out_dim:(j + 1) * out_dim]          # (1, D)
                out = out + jnp.sum(h * wf_j, axis=-1, keepdims=True)
            out_ref[...] = out.reshape(out_ref.shape).astype(out_ref.dtype)

    return kernel


# --------------------------------------------------------------------------
# Parameters & wrapper
# --------------------------------------------------------------------------
def init_params(key, num_filters=NUM_FILTERS, out_dim=OUT_DIM):
    """Deterministic synthetic parameters (weights stored as (in, out))."""
    params = {"fc": [], "linear": None}
    for c in num_filters:
        key, kw, kb = jax.random.split(key, 3)
        w = jax.random.normal(kw, (c, out_dim), jnp.float32) * 0.02
        b = jax.random.normal(kb, (1, out_dim), jnp.float32) * 0.02
        params["fc"].append((w, b))
    key, kw, kb = jax.random.split(key, 3)
    wf = jax.random.normal(kw, (len(num_filters) * out_dim, 1), jnp.float32) * 0.02
    bf = jax.random.normal(kb, (1, 1), jnp.float32) * 0.02
    params["linear"] = (wf, bf)
    return params


def loss_model_forward(inputs_nchw, params, *, chunk_override=None):
    """inputs_nchw: list of len(NUM_FILTERS) arrays, each (B, C_i, H_i, W_i).
    chunk_override (multiple of 128) is for testing the chunked/masked path."""
    n_br = len(inputs_nchw)
    B = int(inputs_nchw[0].shape[0])
    num_filters = tuple(int(x.shape[1]) for x in inputs_nchw)
    hw_list = [int(x.shape[2]) * int(x.shape[3]) for x in inputs_nchw]
    itemsizes = [x.dtype.itemsize for x in inputs_nchw]

    # Native layout: (B, C, H, W) -> (B, C, H*W) is a free (contiguous) reshape.
    xs = [x.reshape(x.shape[0], x.shape[1], -1) for x in inputs_nchw]

    wf, bf = params["linear"]
    out_dim = wf.shape[0] // n_br
    wf_row = wf.reshape(1, -1)                 # (1, n_br*out_dim), free reshape

    vmem_bytes, two_cores = _chip_info()
    bb, chunk = _plan(B, num_filters, hw_list, itemsizes, vmem_bytes, two_cores)
    if chunk_override is not None:
        chunk = int(chunk_override)
    nb = B // bb

    chunk_js = [min(chunk, hw) for hw in hw_list]          # hw<=chunk -> resident
    steps_js = [-(-hw // cj) for hw, cj in zip(hw_list, chunk_js)]
    n_steps = max(steps_js)
    chunked = [j for j in range(n_br) if steps_js[j] > 1]

    args, in_specs = [], []
    for j in range(n_br):
        args.append(xs[j])
        cj, sj = chunk_js[j], steps_js[j]
        if sj == n_steps:
            imap = lambda i, k: (i, 0, k)
        elif sj == 1:
            imap = lambda i, k: (i, 0, 0)       # resident: DMA'd once per batch block
        else:
            # Branch finishes early: clamp its block index so the last valid
            # block stays resident (no OOB DMA, no re-fetch); masking zeroes it.
            imap = (lambda sj_: (lambda i, k: (i, 0, jnp.minimum(k, sj_ - 1))))(sj)
        in_specs.append(pl.BlockSpec((bb, num_filters[j], cj), imap))
    for (w, b) in params["fc"]:
        args.extend([w, b])
        # Constant index_map -> weights DMA'd once, VMEM-resident.
        in_specs.append(pl.BlockSpec(w.shape, lambda i, k: (0, 0)))
        in_specs.append(pl.BlockSpec(b.shape, lambda i, k: (0, 0)))
    args.extend([wf_row, bf])
    in_specs.append(pl.BlockSpec(wf_row.shape, lambda i, k: (0, 0)))
    in_specs.append(pl.BlockSpec(bf.shape, lambda i, k: (0, 0)))

    kernel = _make_kernel(num_filters, out_dim, hw_list, chunk_js, steps_js, n_steps)

    out = pl.pallas_call(
        kernel,
        out_shape=jax.ShapeDtypeStruct((nb, bb, 1), jnp.float32),
        grid=(nb, n_steps),
        in_specs=in_specs,
        out_specs=pl.BlockSpec((1, bb, 1), lambda i, k: (i, 0, 0)),
        scratch_shapes=[pltpu.VMEM((bb, num_filters[j], 128), jnp.float32)
                        for j in chunked],
        compiler_params=pltpu.CompilerParams(
            dimension_semantics=("parallel", "arbitrary"),
            vmem_limit_bytes=(vmem_bytes * 3) // 4),
    )(*args)
    return out.reshape(B, 1)


def reference_forward(inputs_nchw, params):
    """Pure-JAX reference matching the PyTorch module exactly."""
    feats = []
    for x, (w, b) in zip(inputs_nchw, params["fc"]):
        pooled = jnp.mean(x, axis=(2, 3))                # (B, C)
        feats.append(jax.nn.relu(pooled @ w + b))        # (B, OUT_DIM)
    cat = jnp.concatenate(feats, axis=1)                 # (B, 4*OUT_DIM)
    wf, bf = params["linear"]
    return cat @ wf + bf                                 # (B, 1)


if __name__ == "__main__":
    key = jax.random.PRNGKey(0)

    # --- Test 1: small equal-spatial case (B=2, 8x8) -----------------------
    B, H, W = 2, 8, 8
    key, *ikeys = jax.random.split(key, len(NUM_FILTERS) + 1)
    inputs = [jax.random.normal(ikeys[i], (B, NUM_FILTERS[i], H, W), jnp.float32)
              for i in range(len(NUM_FILTERS))]
    key, pkey = jax.random.split(key)
    params = init_params(pkey)

    out = jax.block_until_ready(loss_model_forward(inputs, params))
    ref = reference_forward(inputs, params)
    assert out.shape == (B, 1)
    assert jnp.allclose(out, ref, atol=1e-4, rtol=1e-4), (out, ref)

    # --- Test 2: unequal, non-128-divisible spatial extents -----------------
    # Forces the chunked / masked-tail / clamped-index path (chunk=128 ->
    # per-branch steps 4, 2, 1, 1) to validate the general streaming scheme.
    spat = [(20, 20), (12, 12), (8, 8), (4, 4)]
    key, *ikeys2 = jax.random.split(key, len(NUM_FILTERS) + 1)
    inputs2 = [jax.random.normal(ikeys2[i], (B, NUM_FILTERS[i], h, w), jnp.float32)
               for i, (h, w) in enumerate(spat)]
    out2 = jax.block_until_ready(
        loss_model_forward(inputs2, params, chunk_override=128))
    ref2 = reference_forward(inputs2, params)
    assert jnp.allclose(out2, ref2, atol=1e-4, rtol=1e-4), (out2, ref2)

    print("KERNEL_OK")
</pallas_src>

<mosaic_0001>
module attributes {stable_mosaic.version = 11 : i64} {
  func.func @kernel(%arg0: i32, %arg1: i32, %arg2: memref<2x160x64xf32, #tpu.memory_space<vmem>>, %arg3: memref<2x160x64xf32, #tpu.memory_space<vmem>>, %arg4: memref<2x160x64xf32, #tpu.memory_space<vmem>>, %arg5: memref<2x320x64xf32, #tpu.memory_space<vmem>>, %arg6: memref<160x128xf32, #tpu.memory_space<vmem>>, %arg7: memref<1x128xf32, #tpu.memory_space<vmem>>, %arg8: memref<160x128xf32, #tpu.memory_space<vmem>>, %arg9: memref<1x128xf32, #tpu.memory_space<vmem>>, %arg10: memref<160x128xf32, #tpu.memory_space<vmem>>, %arg11: memref<1x128xf32, #tpu.memory_space<vmem>>, %arg12: memref<320x128xf32, #tpu.memory_space<vmem>>, %arg13: memref<1x128xf32, #tpu.memory_space<vmem>>, %arg14: memref<1x512xf32, #tpu.memory_space<vmem>>, %arg15: memref<1x1xf32, #tpu.memory_space<vmem>>, %arg16: memref<1x2x1xf32, #tpu.memory_space<vmem>>) attributes {dimension_semantics = [#tpu.dimension_semantics<parallel>, #tpu.dimension_semantics<arbitrary>], iteration_bounds = array<i64: 1, 1>, scalar_prefetch = 0 : i64, scratch_operands = 0 : i64, tpu.core_type = #tpu.core_type<tc>, window_params = [{transform_indices = @transform_0, window_bounds = array<i64: 2, 160, 64>}, {transform_indices = @transform_1, window_bounds = array<i64: 2, 160, 64>}, {transform_indices = @transform_2, window_bounds = array<i64: 2, 160, 64>}, {transform_indices = @transform_3, window_bounds = array<i64: 2, 320, 64>}, {pipeline_mode = #tpu.pipeline_mode<synchronous>, transform_indices = @transform_4, window_bounds = array<i64: 160, 128>}, {pipeline_mode = #tpu.pipeline_mode<synchronous>, transform_indices = @transform_5, window_bounds = array<i64: 1, 128>}, {pipeline_mode = #tpu.pipeline_mode<synchronous>, transform_indices = @transform_6, window_bounds = array<i64: 160, 128>}, {pipeline_mode = #tpu.pipeline_mode<synchronous>, transform_indices = @transform_7, window_bounds = array<i64: 1, 128>}, {pipeline_mode = #tpu.pipeline_mode<synchronous>, transform_indices = @transform_8, window_bounds = array<i64: 160, 128>}, {pipeline_mode = #tpu.pipeline_mode<synchronous>, transform_indices = @transform_9, window_bounds = array<i64: 1, 128>}, {pipeline_mode = #tpu.pipeline_mode<synchronous>, transform_indices = @transform_10, window_bounds = array<i64: 320, 128>}, {pipeline_mode = #tpu.pipeline_mode<synchronous>, transform_indices = @transform_11, window_bounds = array<i64: 1, 128>}, {pipeline_mode = #tpu.pipeline_mode<synchronous>, transform_indices = @transform_12, window_bounds = array<i64: 1, 512>}, {pipeline_mode = #tpu.pipeline_mode<synchronous>, transform_indices = @transform_13, window_bounds = array<i64: 1, 1>}, {transform_indices = @transform_14, window_bounds = array<i64: 1, 2, 1>}]} {
    %c0_i32 = arith.constant 0 : i32
    %0 = arith.cmpi eq, %arg1, %c0_i32 : i32
    %1 = arith.extui %0 : i1 to i32
    %c0_i32_0 = arith.constant 0 : i32
    %2 = arith.cmpi ne, %1, %c0_i32_0 : i32
    scf.if %2 {
      %cst = arith.constant 0.000000e+00 : f32
      %3 = vector.broadcast %cst : f32 to vector<2x1xf32>
      %c0 = arith.constant 0 : index
      %c0_1 = arith.constant 0 : index
      %4 = vector.load %arg15[%c0, %c0_1] : memref<1x1xf32, #tpu.memory_space<vmem>>, vector<1x1xf32>
      %5 = vector.broadcast %4 : vector<1x1xf32> to vector<2x1xf32>
      %6 = arith.addf %3, %5 : vector<2x1xf32>
      %c0_2 = arith.constant 0 : index
      %c0_3 = arith.constant 0 : index
      %c0_4 = arith.constant 0 : index
      %7 = vector.load %arg2[%c0_2, %c0_3, %c0_4] : memref<2x160x64xf32, #tpu.memory_space<vmem>>, vector<2x160x64xf32>
      %cst_5 = arith.constant dense<0.000000e+00> : vector<2x160xf32>
      %8 = vector.multi_reduction <add>, %7, %cst_5 [2] : vector<2x160x64xf32> to vector<2x160xf32>
      %cst_6 = arith.constant 1.562500e-02 : f32
      %9 = vector.broadcast %cst_6 : f32 to vector<2x160xf32>
      %10 = arith.mulf %8, %9 : vector<2x160xf32>
      %c0_7 = arith.constant 0 : index
      %c0_8 = arith.constant 0 : index
      %11 = vector.load %arg6[%c0_7, %c0_8] : memref<160x128xf32, #tpu.memory_space<vmem>>, vector<160x128xf32>
      %c0_9 = arith.constant 0 : index
      %c0_10 = arith.constant 0 : index
      %12 = vector.load %arg7[%c0_9, %c0_10] : memref<1x128xf32, #tpu.memory_space<vmem>>, vector<1x128xf32>
      %cst_11 = arith.constant dense<0.000000e+00> : vector<2x128xf32>
      %13 = tpu.matmul %10, %11, %cst_11 {dimension_numbers = #tpu.dot_dimension_numbers<[1], [0], [0], [1], [0, 0, 1, 1], [], []>} : vector<2x160xf32>, vector<160x128xf32>, vector<2x128xf32> -> vector<2x128xf32>
      %14 = vector.broadcast %12 : vector<1x128xf32> to vector<2x128xf32>
      %15 = arith.addf %13, %14 : vector<2x128xf32>
      %cst_12 = arith.constant 0.000000e+00 : f32
      %16 = vector.broadcast %cst_12 : f32 to vector<2x128xf32>
      %17 = arith.maximumf %15, %16 : vector<2x128xf32>
      %c0_13 = arith.constant 0 : index
      %c0_14 = arith.constant 0 : index
      %18 = vector.load %arg14[%c0_13, %c0_14] : memref<1x512xf32, #tpu.memory_space<vmem>>, vector<1x128xf32>
      %19 = vector.broadcast %18 : vector<1x128xf32> to vector<2x128xf32>
      %20 = arith.mulf %17, %19 : vector<2x128xf32>
      %cst_15 = arith.constant dense<0.000000e+00> : vector<2xf32>
      %21 = vector.multi_reduction <add>, %20, %cst_15 [1] : vector<2x128xf32> to vector<2xf32>
      %22 = vector.shape_cast %21 : vector<2xf32> to vector<2x1xf32>
      %23 = arith.addf %6, %22 : vector<2x1xf32>
      %c0_16 = arith.constant 0 : index
      %c0_17 = arith.constant 0 : index
      %c0_18 = arith.constant 0 : index
      %24 = vector.load %arg3[%c0_16, %c0_17, %c0_18] : memref<2x160x64xf32, #tpu.memory_space<vmem>>, vector<2x160x64xf32>
      %cst_19 = arith.constant dense<0.000000e+00> : vector<2x160xf32>
      %25 = vector.multi_reduction <add>, %24, %cst_19 [2] : vector<2x160x64xf32> to vector<2x160xf32>
      %cst_20 = arith.constant 1.562500e-02 : f32
      %26 = vector.broadcast %cst_20 : f32 to vector<2x160xf32>
      %27 = arith.mulf %25, %26 : vector<2x160xf32>
      %c0_21 = arith.constant 0 : index
      %c0_22 = arith.constant 0 : index
      %28 = vector.load %arg8[%c0_21, %c0_22] : memref<160x128xf32, #tpu.memory_space<vmem>>, vector<160x128xf32>
      %c0_23 = arith.constant 0 : index
      %c0_24 = arith.constant 0 : index
      %29 = vector.load %arg9[%c0_23, %c0_24] : memref<1x128xf32, #tpu.memory_space<vmem>>, vector<1x128xf32>
      %cst_25 = arith.constant dense<0.000000e+00> : vector<2x128xf32>
      %30 = tpu.matmul %27, %28, %cst_25 {dimension_numbers = #tpu.dot_dimension_numbers<[1], [0], [0], [1], [0, 0, 1, 1], [], []>} : vector<2x160xf32>, vector<160x128xf32>, vector<2x128xf32> -> vector<2x128xf32>
      %31 = vector.broadcast %29 : vector<1x128xf32> to vector<2x128xf32>
      %32 = arith.addf %30, %31 : vector<2x128xf32>
      %cst_26 = arith.constant 0.000000e+00 : f32
      %33 = vector.broadcast %cst_26 : f32 to vector<2x128xf32>
      %34 = arith.maximumf %32, %33 : vector<2x128xf32>
      %c0_27 = arith.constant 0 : index
      %c128 = arith.constant 128 : index
      %35 = vector.load %arg14[%c0_27, %c128] : memref<1x512xf32, #tpu.memory_space<vmem>>, vector<1x128xf32>
      %36 = vector.broadcast %35 : vector<1x128xf32> to vector<2x128xf32>
      %37 = arith.mulf %34, %36 : vector<2x128xf32>
      %cst_28 = arith.constant dense<0.000000e+00> : vector<2xf32>
      %38 = vector.multi_reduction <add>, %37, %cst_28 [1] : vector<2x128xf32> to vector<2xf32>
      %39 = vector.shape_cast %38 : vector<2xf32> to vector<2x1xf32>
      %40 = arith.addf %23, %39 : vector<2x1xf32>
      %c0_29 = arith.constant 0 : index
      %c0_30 = arith.constant 0 : index
      %c0_31 = arith.constant 0 : index
      %41 = vector.load %arg4[%c0_29, %c0_30, %c0_31] : memref<2x160x64xf32, #tpu.memory_space<vmem>>, vector<2x160x64xf32>
      %cst_32 = arith.constant dense<0.000000e+00> : vector<2x160xf32>
      %42 = vector.multi_reduction <add>, %41, %cst_32 [2] : vector<2x160x64xf32> to vector<2x160xf32>
      %cst_33 = arith.constant 1.562500e-02 : f32
      %43 = vector.broadcast %cst_33 : f32 to vector<2x160xf32>
      %44 = arith.mulf %42, %43 : vector<2x160xf32>
      %c0_34 = arith.constant 0 : index
      %c0_35 = arith.constant 0 : index
      %45 = vector.load %arg10[%c0_34, %c0_35] : memref<160x128xf32, #tpu.memory_space<vmem>>, vector<160x128xf32>
      %c0_36 = arith.constant 0 : index
      %c0_37 = arith.constant 0 : index
      %46 = vector.load %arg11[%c0_36, %c0_37] : memref<1x128xf32, #tpu.memory_space<vmem>>, vector<1x128xf32>
      %cst_38 = arith.constant dense<0.000000e+00> : vector<2x128xf32>
      %47 = tpu.matmul %44, %45, %cst_38 {dimension_numbers = #tpu.dot_dimension_numbers<[1], [0], [0], [1], [0, 0, 1, 1], [], []>} : vector<2x160xf32>, vector<160x128xf32>, vector<2x128xf32> -> vector<2x128xf32>
      %48 = vector.broadcast %46 : vector<1x128xf32> to vector<2x128xf32>
      %49 = arith.addf %47, %48 : vector<2x128xf32>
      %cst_39 = arith.constant 0.000000e+00 : f32
      %50 = vector.broadcast %cst_39 : f32 to vector<2x128xf32>
      %51 = arith.maximumf %49, %50 : vector<2x128xf32>
      %c0_40 = arith.constant 0 : index
      %c256 = arith.constant 256 : index
      %52 = vector.load %arg14[%c0_40, %c256] : memref<1x512xf32, #tpu.memory_space<vmem>>, vector<1x128xf32>
      %53 = vector.broadcast %52 : vector<1x128xf32> to vector<2x128xf32>
      %54 = arith.mulf %51, %53 : vector<2x128xf32>
      %cst_41 = arith.constant dense<0.000000e+00> : vector<2xf32>
      %55 = vector.multi_reduction <add>, %54, %cst_41 [1] : vector<2x128xf32> to vector<2xf32>
      %56 = vector.shape_cast %55 : vector<2xf32> to vector<2x1xf32>
      %57 = arith.addf %40, %56 : vector<2x1xf32>
      %c0_42 = arith.constant 0 : index
      %c0_43 = arith.constant 0 : index
      %c0_44 = arith.constant 0 : index
      %58 = vector.load %arg5[%c0_42, %c0_43, %c0_44] : memref<2x320x64xf32, #tpu.memory_space<vmem>>, vector<2x320x64xf32>
      %cst_45 = arith.constant dense<0.000000e+00> : vector<2x320xf32>
      %59 = vector.multi_reduction <add>, %58, %cst_45 [2] : vector<2x320x64xf32> to vector<2x320xf32>
      %cst_46 = arith.constant 1.562500e-02 : f32
      %60 = vector.broadcast %cst_46 : f32 to vector<2x320xf32>
      %61 = arith.mulf %59, %60 : vector<2x320xf32>
      %c0_47 = arith.constant 0 : index
      %c0_48 = arith.constant 0 : index
      %62 = vector.load %arg12[%c0_47, %c0_48] : memref<320x128xf32, #tpu.memory_space<vmem>>, vector<320x128xf32>
      %c0_49 = arith.constant 0 : index
      %c0_50 = arith.constant 0 : index
      %63 = vector.load %arg13[%c0_49, %c0_50] : memref<1x128xf32, #tpu.memory_space<vmem>>, vector<1x128xf32>
      %cst_51 = arith.constant dense<0.000000e+00> : vector<2x128xf32>
      %64 = tpu.matmul %61, %62, %cst_51 {dimension_numbers = #tpu.dot_dimension_numbers<[1], [0], [0], [1], [0, 0, 1, 1], [], []>} : vector<2x320xf32>, vector<320x128xf32>, vector<2x128xf32> -> vector<2x128xf32>
      %65 = vector.broadcast %63 : vector<1x128xf32> to vector<2x128xf32>
      %66 = arith.addf %64, %65 : vector<2x128xf32>
      %cst_52 = arith.constant 0.000000e+00 : f32
      %67 = vector.broadcast %cst_52 : f32 to vector<2x128xf32>
      %68 = arith.maximumf %66, %67 : vector<2x128xf32>
      %c0_53 = arith.constant 0 : index
      %c384 = arith.constant 384 : index
      %69 = vector.load %arg14[%c0_53, %c384] : memref<1x512xf32, #tpu.memory_space<vmem>>, vector<1x128xf32>
      %70 = vector.broadcast %69 : vector<1x128xf32> to vector<2x128xf32>
      %71 = arith.mulf %68, %70 : vector<2x128xf32>
      %cst_54 = arith.constant dense<0.000000e+00> : vector<2xf32>
      %72 = vector.multi_reduction <add>, %71, %cst_54 [1] : vector<2x128xf32> to vector<2xf32>
      %73 = vector.shape_cast %72 : vector<2xf32> to vector<2x1xf32>
      %74 = arith.addf %57, %73 : vector<2x1xf32>
      %75 = vector.shape_cast %74 : vector<2x1xf32> to vector<1x2x1xf32>
      %c0_55 = arith.constant 0 : index
      %c0_56 = arith.constant 0 : index
      %c0_57 = arith.constant 0 : index
      %76 = vector.load %arg16[%c0_55, %c0_56, %c0_57] : memref<1x2x1xf32, #tpu.memory_space<vmem>>, vector<1x2x1xf32>
      tpu.vector_store %arg16[%c0_55, %c0_56, %c0_57], %75 {strides = array<i32>} : memref<1x2x1xf32, #tpu.memory_space<vmem>>, vector<1x2x1xf32>,
    } else {
    }
    return
  }
  func.func @transform_0(%arg0: i32, %arg1: i32) -> (i32, i32, i32) {
    %c0_i32 = arith.constant 0 : i32
    %c0_i32_0 = arith.constant 0 : i32
    return %arg0, %c0_i32, %arg1 : i32, i32, i32
  }
  func.func @transform_1(%arg0: i32, %arg1: i32) -> (i32, i32, i32) {
    %c0_i32 = arith.constant 0 : i32
    %c0_i32_0 = arith.constant 0 : i32
    return %arg0, %c0_i32, %arg1 : i32, i32, i32
  }
  func.func @transform_2(%arg0: i32, %arg1: i32) -> (i32, i32, i32) {
    %c0_i32 = arith.constant 0 : i32
    %c0_i32_0 = arith.constant 0 : i32
    return %arg0, %c0_i32, %arg1 : i32, i32, i32
  }
  func.func @transform_3(%arg0: i32, %arg1: i32) -> (i32, i32, i32) {
    %c0_i32 = arith.constant 0 : i32
    %c0_i32_0 = arith.constant 0 : i32
    return %arg0, %c0_i32, %arg1 : i32, i32, i32
  }
  func.func @transform_4(%arg0: i32, %arg1: i32) -> (i32, i32) {
    %c0_i32 = arith.constant 0 : i32
    %c0_i32_0 = arith.constant 0 : i32
    %c0_i32_1 = arith.constant 0 : i32
    return %c0_i32, %c0_i32_0 : i32, i32
  }
  func.func @transform_5(%arg0: i32, %arg1: i32) -> (i32, i32) {
    %c0_i32 = arith.constant 0 : i32
    %c0_i32_0 = arith.constant 0 : i32
    %c0_i32_1 = arith.constant 0 : i32
    return %c0_i32, %c0_i32_0 : i32, i32
  }
  func.func @transform_6(%arg0: i32, %arg1: i32) -> (i32, i32) {
    %c0_i32 = arith.constant 0 : i32
    %c0_i32_0 = arith.constant 0 : i32
    %c0_i32_1 = arith.constant 0 : i32
    return %c0_i32, %c0_i32_0 : i32, i32
  }
  func.func @transform_7(%arg0: i32, %arg1: i32) -> (i32, i32) {
    %c0_i32 = arith.constant 0 : i32
    %c0_i32_0 = arith.constant 0 : i32
    %c0_i32_1 = arith.constant 0 : i32
    return %c0_i32, %c0_i32_0 : i32, i32
  }
  func.func @transform_8(%arg0: i32, %arg1: i32) -> (i32, i32) {
    %c0_i32 = arith.constant 0 : i32
    %c0_i32_0 = arith.constant 0 : i32
    %c0_i32_1 = arith.constant 0 : i32
    return %c0_i32, %c0_i32_0 : i32, i32
  }
  func.func @transform_9(%arg0: i32, %arg1: i32) -> (i32, i32) {
    %c0_i32 = arith.constant 0 : i32
    %c0_i32_0 = arith.constant 0 : i32
    %c0_i32_1 = arith.constant 0 : i32
    return %c0_i32, %c0_i32_0 : i32, i32
  }
  func.func @transform_10(%arg0: i32, %arg1: i32) -> (i32, i32) {
    %c0_i32 = arith.constant 0 : i32
    %c0_i32_0 = arith.constant 0 : i32
    %c0_i32_1 = arith.constant 0 : i32
    return %c0_i32, %c0_i32_0 : i32, i32
  }
  func.func @transform_11(%arg0: i32, %arg1: i32) -> (i32, i32) {
    %c0_i32 = arith.constant 0 : i32
    %c0_i32_0 = arith.constant 0 : i32
    %c0_i32_1 = arith.constant 0 : i32
    return %c0_i32, %c0_i32_0 : i32, i32
  }
  func.func @transform_12(%arg0: i32, %arg1: i32) -> (i32, i32) {
    %c0_i32 = arith.constant 0 : i32
    %c0_i32_0 = arith.constant 0 : i32
    %c0_i32_1 = arith.constant 0 : i32
    return %c0_i32, %c0_i32_0 : i32, i32
  }
  func.func @transform_13(%arg0: i32, %arg1: i32) -> (i32, i32) {
    %c0_i32 = arith.constant 0 : i32
    %c0_i32_0 = arith.constant 0 : i32
    %c0_i32_1 = arith.constant 0 : i32
    return %c0_i32, %c0_i32_0 : i32, i32
  }
  func.func @transform_14(%arg0: i32, %arg1: i32) -> (i32, i32, i32) {
    %c0_i32 = arith.constant 0 : i32
    %c0_i32_0 = arith.constant 0 : i32
    %c0_i32_1 = arith.constant 0 : i32
    return %arg0, %c0_i32, %c0_i32_0 : i32, i32, i32
  }
}

</mosaic_0001>

<llo_original>
// kernel: tpu_custom_call.1
$region0: #{tpu_custom_call.1}
  #allocation0 [shape = 'u32[]', space=smem, size = 0x4, offset = 0x4, fixed_abs, tag = 'smem constant byte address 0x4 - core index']
  #allocation1 [shape = 'u32[72,128]{1,0:T(1,128)}', space=vmem, size = 0x9000, scoped, tag = 'internal scratch']
  #allocation2 [shape = 'f32[1,1]{1,0:T(1,128)S(1)}', space=vmem, size = 0x200, scoped, tag = 'scoped memory for tpu_custom_call.1']
  %s0 = inlined_call_operand.vmem [shape: f32[2,160,64], index: 0, kind: input, shape index: {}]
  %s1 = inlined_call_operand.vmem [shape: f32[2,160,64], index: 1, kind: input, shape index: {}]
  %s2 = inlined_call_operand.vmem [shape: f32[2,160,64], index: 2, kind: input, shape index: {}]
  %s3 = inlined_call_operand.vmem [shape: f32[2,320,64], index: 3, kind: input, shape index: {}]
  %s4 = inlined_call_operand.vmem [shape: f32[160,128], index: 4, kind: input, shape index: {}]
  %s5 = inlined_call_operand.vmem [shape: f32[1,128], index: 5, kind: input, shape index: {}]
  %s6 = inlined_call_operand.vmem [shape: f32[160,128], index: 6, kind: input, shape index: {}]
  %s7 = inlined_call_operand.vmem [shape: f32[1,128], index: 7, kind: input, shape index: {}]
  %s8 = inlined_call_operand.vmem [shape: f32[160,128], index: 8, kind: input, shape index: {}]
  %s9 = inlined_call_operand.vmem [shape: f32[1,128], index: 9, kind: input, shape index: {}]
  %s10 = inlined_call_operand.vmem [shape: f32[320,128], index: 10, kind: input, shape index: {}]
  %s11 = inlined_call_operand.vmem [shape: f32[1,128], index: 11, kind: input, shape index: {}]
  %s12 = inlined_call_operand.vmem [shape: f32[1,512], index: 12, kind: input, shape index: {}]
  %s13 = inlined_call_operand.<no memory space> [shape: f32[1,1], index: 13, kind: input, shape index: {}]
  %s14 = inlined_call_operand.vmem [shape: f32[1,2,1], index: 14, kind: output, shape index: {}]
  %s15 = sld [smem:[#allocation0]]
  $region70: #{tpu_custom_call.1} parent=0
    _
  %s17 = ssub.s32 1, %s15
  %s18 = scalar_select 0, %s17, %s15
  %v19 = vstv %s13
  %20 = vst [vmem:[#allocation2] sm:$0x1] %v19
  // Predicated region
  $region2: #{tpu_custom_call.1} parent=0 // pred_check
    _
  $region3: #{tpu_custom_call.1} parent=0 // pred_check_branch
    %22 = sbr.rel (0) target = $region5
  $region4: #{tpu_custom_call.1} parent=0 // pred_region
    _
  $region5: #{tpu_custom_call.1} parent=0 // pred_fallthru
    _
  // Predicated region
  $region6: #{tpu_custom_call.1} parent=0 // pred_check
    _
  $region7: #{tpu_custom_call.1} parent=0 // pred_check_branch
    %24 = sbr.rel (0) target = $region9
  $region8: #{tpu_custom_call.1} parent=0 // pred_region
    _
  $region9: #{tpu_custom_call.1} parent=0 // pred_fallthru
    _
  // Predicated region
  $region10: #{tpu_custom_call.1} parent=0 // pred_check
    _
  $region11: #{tpu_custom_call.1} parent=0 // pred_check_branch
    %26 = sbr.rel (0) target = $region13
  $region12: #{tpu_custom_call.1} parent=0 // pred_region
    _
  $region13: #{tpu_custom_call.1} parent=0 // pred_fallthru
    _
  // Predicated region
  $region14: #{tpu_custom_call.1} parent=0 // pred_check
    _
  $region15: #{tpu_custom_call.1} parent=0 // pred_check_branch
    %28 = sbr.rel (0) target = $region17
  $region16: #{tpu_custom_call.1} parent=0 // pred_region
    _
  $region17: #{tpu_custom_call.1} parent=0 // pred_fallthru
    _
  // Predicated region
  $region18: #{tpu_custom_call.1} parent=0 // pred_check
    _
  $region19: #{tpu_custom_call.1} parent=0 // pred_check_branch
    %30 = sbr.rel (0) target = $region21
  $region20: #{tpu_custom_call.1} parent=0 // pred_region
    _
  $region21: #{tpu_custom_call.1} parent=0 // pred_fallthru
    _
  // Predicated region
  $region22: #{tpu_custom_call.1} parent=0 // pred_check
    _
  $region23: #{tpu_custom_call.1} parent=0 // pred_check_branch
    %32 = sbr.rel (0) target = $region25
  $region24: #{tpu_custom_call.1} parent=0 // pred_region
    _
  $region25: #{tpu_custom_call.1} parent=0 // pred_fallthru
    _
  // Predicated region
  $region26: #{tpu_custom_call.1} parent=0 // pred_check
    _
  $region27: #{tpu_custom_call.1} parent=0 // pred_check_branch
    %34 = sbr.rel (0) target = $region29
  $region28: #{tpu_custom_call.1} parent=0 // pred_region
    _
  $region29: #{tpu_custom_call.1} parent=0 // pred_fallthru
    _
  // Predicated region
  $region30: #{tpu_custom_call.1} parent=0 // pred_check
    _
  $region31: #{tpu_custom_call.1} parent=0 // pred_check_branch
    %36 = sbr.rel (0) target = $region33
  $region32: #{tpu_custom_call.1} parent=0 // pred_region
    _
  $region33: #{tpu_custom_call.1} parent=0 // pred_fallthru
    _
  // Predicated region
  $region34: #{tpu_custom_call.1} parent=0 // pred_check
    _
  $region35: #{tpu_custom_call.1} parent=0 // pred_check_branch
    %38 = sbr.rel (0) target = $region37
  $region36: #{tpu_custom_call.1} parent=0 // pred_region
    _
  $region37: #{tpu_custom_call.1} parent=0 // pred_fallthru
    _
  // Predicated region
  $region38: #{tpu_custom_call.1} parent=0 // pred_check
    _
  $region39: #{tpu_custom_call.1} parent=0 // pred_check_branch
    %40 = sbr.rel (0) target = $region41
  $region40: #{tpu_custom_call.1} parent=0 // pred_region
    _
  $region41: #{tpu_custom_call.1} parent=0 // pred_fallthru
    _
  // Predicated region
  $region42: #{tpu_custom_call.1} parent=0 // pred_check
    _
  $region43: #{tpu_custom_call.1} parent=0 // pred_check_branch
    %42 = sbr.rel (0) target = $region45
  $region44: #{tpu_custom_call.1} parent=0 // pred_region
    _
  $region45: #{tpu_custom_call.1} parent=0 // pred_fallthru
    _
  // Predicated region
  $region46: #{tpu_custom_call.1} parent=0 // pred_check
    _
  $region47: #{tpu_custom_call.1} parent=0 // pred_check_branch
    %44 = sbr.rel (0) target = $region49
  $region48: #{tpu_custom_call.1} parent=0 // pred_region
    _
  $region49: #{tpu_custom_call.1} parent=0 // pred_fallthru
    _
  // Predicated region
  $region50: #{tpu_custom_call.1} parent=0 // pred_check
    _
  $region51: #{tpu_custom_call.1} parent=0 // pred_check_branch
    %46 = sbr.rel (0) target = $region53
  $region52: #{tpu_custom_call.1} parent=0 // pred_region
    _
  $region53: #{tpu_custom_call.1} parent=0 // pred_fallthru
    _
  // Predicated region
  $region54: #{tpu_custom_call.1} parent=0 // pred_check
    _
  $region55: #{tpu_custom_call.1} parent=0 // pred_check_branch
    %48 = sbr.rel (0) target = $region57
  $region56: #{tpu_custom_call.1} parent=0 // pred_region
    _
  $region57: #{tpu_custom_call.1} parent=0 // pred_fallthru
    _
  %p49 = scmp.eq.s32.totalorder 0, 0
  // Predicated region
  $region58: #{tpu_custom_call.1} parent=0 // pred_check
    %p50 = pneg %p49
  $region59: #{tpu_custom_call.1} parent=0 // pred_check_branch
    %52 = sbr.rel (%p50) target = $region61
  $region60: #{tpu_custom_call.1} parent=0 // pred_region
    %v53 = vld [vmem:[#allocation2] sm:$0x1]
    %v55 = vperm.slane %v53, 0
    %v57 = vadd.f32 %v55, 0.0
    %v58 = vld [vmem:[%s0] sm:$0xff]
    %v59 = vld [vmem:[%s0 + $0x8] sm:$0xff]
    %v60 = vld [vmem:[%s0 + $0x10] sm:$0xff]
    %v61 = vld [vmem:[%s0 + $0x18] sm:$0xff]
    %v62 = vld [vmem:[%s0 + $0x20] sm:$0xff]
    %v63 = vld [vmem:[%s0 + $0x28] sm:$0xff]
    %v64 = vld [vmem:[%s0 + $0x30] sm:$0xff]
    %v65 = vld [vmem:[%s0 + $0x38] sm:$0xff]
    %v66 = vld [vmem:[%s0 + $0x40] sm:$0xff]
    %v67 = vld [vmem:[%s0 + $0x48] sm:$0xff]
    %v68 = vld [vmem:[%s0 + $0x50] sm:$0xff]
    %v69 = vld [vmem:[%s0 + $0x58] sm:$0xff]
    %v70 = vld [vmem:[%s0 + $0x60] sm:$0xff]
    %v71 = vld [vmem:[%s0 + $0x68] sm:$0xff]
    %v72 = vld [vmem:[%s0 + $0x70] sm:$0xff]
    %v73 = vld [vmem:[%s0 + $0x78] sm:$0xff]
    %v74 = vld [vmem:[%s0 + $0x80] sm:$0xff]
    %v75 = vld [vmem:[%s0 + $0x88] sm:$0xff]
    %v76 = vld [vmem:[%s0 + $0x90] sm:$0xff]
    %v77 = vld [vmem:[%s0 + $0x98] sm:$0xff]
    %v78 = vld [vmem:[%s0 + $0xa0] sm:$0xff]
    %v79 = vld [vmem:[%s0 + $0xa8] sm:$0xff]
    %v80 = vld [vmem:[%s0 + $0xb0] sm:$0xff]
    %v81 = vld [vmem:[%s0 + $0xb8] sm:$0xff]
    %v82 = vld [vmem:[%s0 + $0xc0] sm:$0xff]
    %v83 = vld [vmem:[%s0 + $0xc8] sm:$0xff]
    %v84 = vld [vmem:[%s0 + $0xd0] sm:$0xff]
    %v85 = vld [vmem:[%s0 + $0xd8] sm:$0xff]
    %v86 = vld [vmem:[%s0 + $0xe0] sm:$0xff]
    %v87 = vld [vmem:[%s0 + $0xe8] sm:$0xff]
    %v88 = vld [vmem:[%s0 + $0xf0] sm:$0xff]
    %v89 = vld [vmem:[%s0 + $0xf8] sm:$0xff]
    %v90 = vld [vmem:[%s0 + $0x100] sm:$0xff]
    %v91 = vld [vmem:[%s0 + $0x108] sm:$0xff]
    %v92 = vld [vmem:[%s0 + $0x110] sm:$0xff]
    %v93 = vld [vmem:[%s0 + $0x118] sm:$0xff]
    %v94 = vld [vmem:[%s0 + $0x120] sm:$0xff]
    %v95 = vld [vmem:[%s0 + $0x128] sm:$0xff]
    %v96 = vld [vmem:[%s0 + $0x130] sm:$0xff]
    %v97 = vld [vmem:[%s0 + $0x138] sm:$0xff]
    %vm98 = vcmask 523264
    %v99 = vsel %vm98, %v58, 0.0
    %100 = vadd.xlane.f32.xlu0 %v99
    %v101 = vpop.xlane.xlu0 %100
    %v102 = vsel %vm98, %v59, 0.0
    %103 = vadd.xlane.f32.xlu0 %v102
    %v104 = vpop.xlane.xlu0 %103
    %v105 = vsel %vm98, %v60, 0.0
    %106 = vadd.xlane.f32.xlu0 %v105
    %v107 = vpop.xlane.xlu0 %106
    %v108 = vsel %vm98, %v61, 0.0
    %109 = vadd.xlane.f32.xlu0 %v108
    %v110 = vpop.xlane.xlu0 %109
    %v111 = vsel %vm98, %v62, 0.0
    %112 = vadd.xlane.f32.xlu0 %v111
    %v113 = vpop.xlane.xlu0 %112
    %v114 = vsel %vm98, %v63, 0.0
    %115 = vadd.xlane.f32.xlu0 %v114
    %v116 = vpop.xlane.xlu0 %115
    %v117 = vsel %vm98, %v64, 0.0
    %118 = vadd.xlane.f32.xlu0 %v117
    %v119 = vpop.xlane.xlu0 %118
    %v120 = vsel %vm98, %v65, 0.0
    %121 = vadd.xlane.f32.xlu0 %v120
    %v122 = vpop.xlane.xlu0 %121
    %v123 = vsel %vm98, %v66, 0.0
    %124 = vadd.xlane.f32.xlu0 %v123
    %v125 = vpop.xlane.xlu0 %124
    %v126 = vsel %vm98, %v67, 0.0
    %127 = vadd.xlane.f32.xlu0 %v126
    %v128 = vpop.xlane.xlu0 %127
    %v129 = vsel %vm98, %v68, 0.0
    %130 = vadd.xlane.f32.xlu0 %v129
    %v131 = vpop.xlane.xlu0 %130
    %v132 = vsel %vm98, %v69, 0.0
    %133 = vadd.xlane.f32.xlu0 %v132
    %v134 = vpop.xlane.xlu0 %133
    %v135 = vsel %vm98, %v70, 0.0
    %136 = vadd.xlane.f32.xlu0 %v135
    %v137 = vpop.xlane.xlu0 %136
    %v138 = vsel %vm98, %v71, 0.0
    %139 = vadd.xlane.f32.xlu0 %v138
    %v140 = vpop.xlane.xlu0 %139
    %v141 = vsel %vm98, %v72, 0.0
    %142 = vadd.xlane.f32.xlu0 %v141
    %v143 = vpop.xlane.xlu0 %142
    %v144 = vsel %vm98, %v73, 0.0
    %145 = vadd.xlane.f32.xlu0 %v144
    %v146 = vpop.xlane.xlu0 %145
    %v147 = vsel %vm98, %v74, 0.0
    %148 = vadd.xlane.f32.xlu0 %v147
    %v149 = vpop.xlane.xlu0 %148
    %v150 = vsel %vm98, %v75, 0.0
    %151 = vadd.xlane.f32.xlu0 %v150
    %v152 = vpop.xlane.xlu0 %151
    %v153 = vsel %vm98, %v76, 0.0
    %154 = vadd.xlane.f32.xlu0 %v153
    %v155 = vpop.xlane.xlu0 %154
    %v156 = vsel %vm98, %v77, 0.0
    %157 = vadd.xlane.f32.xlu0 %v156
    %v158 = vpop.xlane.xlu0 %157
    %v159 = vsel %vm98, %v78, 0.0
    %160 = vadd.xlane.f32.xlu0 %v159
    %v161 = vpop.xlane.xlu0 %160
    %v162 = vsel %vm98, %v79, 0.0
    %163 = vadd.xlane.f32.xlu0 %v162
    %v164 = vpop.xlane.xlu0 %163
    %v165 = vsel %vm98, %v80, 0.0
    %166 = vadd.xlane.f32.xlu0 %v165
    %v167 = vpop.xlane.xlu0 %166
    %v168 = vsel %vm98, %v81, 0.0
    %169 = vadd.xlane.f32.xlu0 %v168
    %v170 = vpop.xlane.xlu0 %169
    %v171 = vsel %vm98, %v82, 0.0
    %172 = vadd.xlane.f32.xlu0 %v171
    %v173 = vpop.xlane.xlu0 %172
    %v174 = vsel %vm98, %v83, 0.0
    %175 = vadd.xlane.f32.xlu0 %v174
    %v176 = vpop.xlane.xlu0 %175
    %v177 = vsel %vm98, %v84, 0.0
    %178 = vadd.xlane.f32.xlu0 %v177
    %v179 = vpop.xlane.xlu0 %178
    %v180 = vsel %vm98, %v85, 0.0
    %181 = vadd.xlane.f32.xlu0 %v180
    %v182 = vpop.xlane.xlu0 %181
    %v183 = vsel %vm98, %v86, 0.0
    %184 = vadd.xlane.f32.xlu0 %v183
    %v185 = vpop.xlane.xlu0 %184
    %v186 = vsel %vm98, %v87, 0.0
    %187 = vadd.xlane.f32.xlu0 %v186
    %v188 = vpop.xlane.xlu0 %187
    %v189 = vsel %vm98, %v88, 0.0
    %190 = vadd.xlane.f32.xlu0 %v189
    %v191 = vpop.xlane.xlu0 %190
    %v192 = vsel %vm98, %v89, 0.0
    %193 = vadd.xlane.f32.xlu0 %v192
    %v194 = vpop.xlane.xlu0 %193
    %v195 = vsel %vm98, %v90, 0.0
    %196 = vadd.xlane.f32.xlu0 %v195
    %v197 = vpop.xlane.xlu0 %196
    %v198 = vsel %vm98, %v91, 0.0
    %199 = vadd.xlane.f32.xlu0 %v198
    %v200 = vpop.xlane.xlu0 %199
    %v201 = vsel %vm98, %v92, 0.0
    %202 = vadd.xlane.f32.xlu0 %v201
    %v203 = vpop.xlane.xlu0 %202
    %v204 = vsel %vm98, %v93, 0.0
    %205 = vadd.xlane.f32.xlu0 %v204
    %v206 = vpop.xlane.xlu0 %205
    %v207 = vsel %vm98, %v94, 0.0
    %208 = vadd.xlane.f32.xlu0 %v207
    %v209 = vpop.xlane.xlu0 %208
    %v210 = vsel %vm98, %v95, 0.0
    %211 = vadd.xlane.f32.xlu0 %v210
    %v212 = vpop.xlane.xlu0 %211
    %v213 = vsel %vm98, %v96, 0.0
    %214 = vadd.xlane.f32.xlu0 %v213
    %v215 = vpop.xlane.xlu0 %214
    %v216 = vsel %vm98, %v97, 0.0
    %217 = vadd.xlane.f32.xlu0 %v216
    %v218 = vpop.xlane.xlu0 %217
    %v219 = vmul.f32 %v101, 0.015625
    %v220 = vmul.f32 %v104, 0.015625
    %v221 = vmul.f32 %v107, 0.015625
    %v222 = vmul.f32 %v110, 0.015625
    %v223 = vmul.f32 %v113, 0.015625
    %v224 = vmul.f32 %v116, 0.015625
    %v225 = vmul.f32 %v119, 0.015625
    %v226 = vmul.f32 %v122, 0.015625
    %v227 = vmul.f32 %v125, 0.015625
    %v228 = vmul.f32 %v128, 0.015625
    %v229 = vmul.f32 %v131, 0.015625
    %v230 = vmul.f32 %v134, 0.015625
    %v231 = vmul.f32 %v137, 0.015625
    %v232 = vmul.f32 %v140, 0.015625
    %v233 = vmul.f32 %v143, 0.015625
    %v234 = vmul.f32 %v146, 0.015625
    %v235 = vmul.f32 %v149, 0.015625
    %v236 = vmul.f32 %v152, 0.015625
    %v237 = vmul.f32 %v155, 0.015625
    %v238 = vmul.f32 %v158, 0.015625
    %v239 = vmul.f32 %v161, 0.015625
    %v240 = vmul.f32 %v164, 0.015625
    %v241 = vmul.f32 %v167, 0.015625
    %v242 = vmul.f32 %v170, 0.015625
    %v243 = vmul.f32 %v173, 0.015625
    %v244 = vmul.f32 %v176, 0.015625
    %v245 = vmul.f32 %v179, 0.015625
    %v246 = vmul.f32 %v182, 0.015625
    %v247 = vmul.f32 %v185, 0.015625
    %v248 = vmul.f32 %v188, 0.015625
    %v249 = vmul.f32 %v191, 0.015625
    %v250 = vmul.f32 %v194, 0.015625
    %v251 = vmul.f32 %v197, 0.015625
    %v252 = vmul.f32 %v200, 0.015625
    %v253 = vmul.f32 %v203, 0.015625
    %v254 = vmul.f32 %v206, 0.015625
    %v255 = vmul.f32 %v209, 0.015625
    %v256 = vmul.f32 %v212, 0.015625
    %v257 = vmul.f32 %v215, 0.015625
    %v258 = vmul.f32 %v218, 0.015625
    %v259 = vld [vmem:[%s4] sm:$0xff]
    %v260 = vld [vmem:[%s4 + $0x8] sm:$0xff]
    %v261 = vld [vmem:[%s4 + $0x10] sm:$0xff]
    %v262 = vld [vmem:[%s4 + $0x18] sm:$0xff]
    %v263 = vld [vmem:[%s4 + $0x20] sm:$0xff]
    %v264 = vld [vmem:[%s4 + $0x28] sm:$0xff]
    %v265 = vld [vmem:[%s4 + $0x30] sm:$0xff]
    %v266 = vld [vmem:[%s4 + $0x38] sm:$0xff]
    %v267 = vld [vmem:[%s4 + $0x40] sm:$0xff]
    %v268 = vld [vmem:[%s4 + $0x48] sm:$0xff]
    %v269 = vld [vmem:[%s4 + $0x50] sm:$0xff]
    %v270 = vld [vmem:[%s4 + $0x58] sm:$0xff]
    %v271 = vld [vmem:[%s4 + $0x60] sm:$0xff]
    %v272 = vld [vmem:[%s4 + $0x68] sm:$0xff]
    %v273 = vld [vmem:[%s4 + $0x70] sm:$0xff]
    %v274 = vld [vmem:[%s4 + $0x78] sm:$0xff]
    %v275 = vld [vmem:[%s4 + $0x80] sm:$0xff]
    %v276 = vld [vmem:[%s4 + $0x88] sm:$0xff]
    %v277 = vld [vmem:[%s4 + $0x90] sm:$0xff]
    %v278 = vld [vmem:[%s4 + $0x98] sm:$0xff]
    %v279 = vld [vmem:[%s5] sm:$0x1]
    %v281 = vperm.slane %v279, 0
    %v323 = vlaneseq
    %v324 = vand.u32 %v323, 127
    %v325 = vperm.slane %v219, %v324
    %v326 = vadd.s32 %v324, 4294967288
    %v327 = vperm.slane %v220, %v326
    %vm328 = vcmask 130112
    %v329 = vsel %vm328, %v327, %v325
    %v330 = vadd.s32 %v324, 4294967280
    %v331 = vperm.slane %v221, %v330
    %vm332 = vcmask 195712
    %v333 = vsel %vm332, %v331, %v329
    %v334 = vadd.s32 %v324, 4294967272
    %v335 = vperm.slane %v222, %v334
    %vm336 = vcmask 261312
    %v337 = vsel %vm336, %v335, %v333
    %v338 = vadd.s32 %v324, 4294967264
    %v339 = vperm.slane %v223, %v338
    %vm340 = vcmask 326912
    %v341 = vsel %vm340, %v339, %v337
    %v342 = vadd.s32 %v324, 4294967256
    %v343 = vperm.slane %v224, %v342
    %vm344 = vcmask 392512
    %v345 = vsel %vm344, %v343, %v341
    %v346 = vadd.s32 %v324, 4294967248
    %v347 = vperm.slane %v225, %v346
    %vm348 = vcmask 458112
    %v349 = vsel %vm348, %v347, %v345
    %v350 = vadd.s32 %v324, 4294967240
    %v351 = vperm.slane %v226, %v350
    %vm352 = vcmask 523712
    %v353 = vsel %vm352, %v351, %v349
    %v354 = vadd.s32 %v324, 4294967232
    %v355 = vperm.slane %v227, %v354
    %vm356 = vcmask 589312
    %v357 = vsel %vm356, %v355, %v353
    %v358 = vadd.s32 %v324, 4294967224
    %v359 = vperm.slane %v228, %v358
    %vm360 = vcmask 654912
    %v361 = vsel %vm360, %v359, %v357
    %v362 = vadd.s32 %v324, 4294967216
    %v363 = vperm.slane %v229, %v362
    %vm364 = vcmask 720512
    %v365 = vsel %vm364, %v363, %v361
    %v366 = vadd.s32 %v324, 4294967208
    %v367 = vperm.slane %v230, %v366
    %vm368 = vcmask 786112
    %v369 = vsel %vm368, %v367, %v365
    %v370 = vadd.s32 %v324, 4294967200
    %v371 = vperm.slane %v231, %v370
    %vm372 = vcmask 851712
    %v373 = vsel %vm372, %v371, %v369
    %v374 = vadd.s32 %v324, 4294967192
    %v375 = vperm.slane %v232, %v374
    %vm376 = vcmask 917312
    %v377 = vsel %vm376, %v375, %v373
    %v378 = vadd.s32 %v324, 4294967184
    %v379 = vperm.slane %v233, %v378
    %vm380 = vcmask 982912
    %v381 = vsel %vm380, %v379, %v377
    %v382 = vadd.s32 %v324, 4294967176
    %v383 = vperm.slane %v234, %v382
    %vm384 = vcmask 1048512
    %v385 = vsel %vm384, %v383, %v381
    %v386 = vperm.slane %v235, %v324
    %v387 = vperm.slane %v236, %v326
    %v388 = vsel %vm328, %v387, %v386
    %v389 = vperm.slane %v237, %v330
    %v390 = vsel %vm332, %v389, %v388
    %v391 = vperm.slane %v238, %v334
    %v392 = vsel %vm336, %v391, %v390
    %v393 = vperm.slane %v239, %v324
    %v394 = vperm.slane %v240, %v326
    %v395 = vsel %vm328, %v394, %v393
    %v396 = vperm.slane %v241, %v330
    %v397 = vsel %vm332, %v396, %v395
    %v398 = vperm.slane %v242, %v334
    %v399 = vsel %vm336, %v398, %v397
    %v400 = vperm.slane %v243, %v338
    %v401 = vsel %vm340, %v400, %v399
    %v402 = vperm.slane %v244, %v342
    %v403 = vsel %vm344, %v402, %v401
    %v404 = vperm.slane %v245, %v346
    %v405 = vsel %vm348, %v404, %v403
    %v406 = vperm.slane %v246, %v350
    %v407 = vsel %vm352, %v406, %v405
    %v408 = vperm.slane %v247, %v354
    %v409 = vsel %vm356, %v408, %v407
    %v410 = vperm.slane %v248, %v358
    %v411 = vsel %vm360, %v410, %v409
    %v412 = vperm.slane %v249, %v362
    %v413 = vsel %vm364, %v412, %v411
    %v414 = vperm.slane %v250, %v366
    %v415 = vsel %vm368, %v414, %v413
    %v416 = vperm.slane %v251, %v370
    %v417 = vsel %vm372, %v416, %v415
    %v418 = vperm.slane %v252, %v374
    %v419 = vsel %vm376, %v418, %v417
    %v420 = vperm.slane %v253, %v378
    %v421 = vsel %vm380, %v420, %v419
    %v422 = vperm.slane %v254, %v382
    %v423 = vsel %vm384, %v422, %v421
    %v424 = vperm.slane %v255, %v324
    %v425 = vperm.slane %v256, %v326
    %v426 = vsel %vm328, %v425, %v424
    %v427 = vperm.slane %v257, %v330
    %v428 = vsel %vm332, %v427, %v426
    %v429 = vperm.slane %v258, %v334
    %v430 = vsel %vm336, %v429, %v428
    %vm431 = vcmask 1041409
    %v432 = vsel %vm431, %v423, %v385
    %v433 = vsel %vm431, %v430, %v392
    %vm435 = vcmask 261120
    %v436 = vsel %vm435, %v433, 0
    %438 = vmatpush.msra.mxu0 %v274
    %439 = vmatpush.msra.mxu0 %v273
    %440 = vmatpush.msra.mxu0 %v272
    %441 = vmatpush.msra.mxu0 %v271
    %442 = vmatpush.msra.mxu0 %v270
    %443 = vmatpush.msra.mxu0 %v269
    %444 = vmatpush.msra.mxu0 %v268
    %445 = vmatpush.msra.mxu0 %v267
    %446 = vmatpush.msra.mxu0 %v266
    %447 = vmatpush.msra.mxu0 %v265
    %448 = vmatpush.msra.mxu0 %v264
    %449 = vmatpush.msra.mxu0 %v263
    %450 = vmatpush.msra.mxu0 %v262
    %451 = vmatpush.msra.mxu0 %v261
    %452 = vmatpush.msra.mxu0 %v260
    %453 = vmatpush.msra.mxu0 %v259
    %454 = vmatmul.f32.gmra.mxu0 %v432
    %v455 = vpop.f32.mrf.mxu0
    %v456 = vadd.f32 %v281, %v455
    %457 = vdwg.mxu0
    %458 = vmatpush.msra.mxu0 0.0
    %459 = vmatpush.msra.mxu0 0.0
    %460 = vmatpush.msra.mxu0 0.0
    %461 = vmatpush.msra.mxu0 0.0
    %462 = vmatpush.msra.mxu0 0.0
    %463 = vmatpush.msra.mxu0 0.0
    %464 = vmatpush.msra.mxu0 0.0
    %465 = vmatpush.msra.mxu0 0.0
    %466 = vmatpush.msra.mxu0 0.0
    %467 = vmatpush.msra.mxu0 0.0
    %468 = vmatpush.msra.mxu0 0.0
    %469 = vmatpush.msra.mxu0 0.0
    %470 = vmatpush.msra.mxu0 %v278
    %471 = vmatpush.msra.mxu0 %v277
    %472 = vmatpush.msra.mxu0 %v276
    %473 = vmatpush.msra.mxu0 %v275
    %474 = vmatmul.f32.gmra.mxu0 %v436
    %v475 = vpop.f32.mrf.mxu0
    %v476 = vadd.f32 %v456, %v475
    %477 = vdwg.mxu0
    %v478 = vmax.f32 %v476, 0.0
    %v479 = vld [vmem:[%s12] sm:$0x1]
    %v481 = vperm.slane %v479, 0
    %v483 = vmul.f32 %v478, %v481
    %vm484 = vcmask 1041408
    %v485 = vsel %vm484, %v483, 0.0
    %486 = vadd.xlane.f32.xlu0 %v485
    %v487 = vpop.xlane.xlu0 %486
    %v488 = vadd.f32 %v57, %v487
    %v489 = vld [vmem:[%s1] sm:$0xff]
    %v490 = vld [vmem:[%s1 + $0x8] sm:$0xff]
    %v491 = vld [vmem:[%s1 + $0x10] sm:$0xff]
    %v492 = vld [vmem:[%s1 + $0x18] sm:$0xff]
    %v493 = vld [vmem:[%s1 + $0x20] sm:$0xff]
    %v494 = vld [vmem:[%s1 + $0x28] sm:$0xff]
    %v495 = vld [vmem:[%s1 + $0x30] sm:$0xff]
    %v496 = vld [vmem:[%s1 + $0x38] sm:$0xff]
    %v497 = vld [vmem:[%s1 + $0x40] sm:$0xff]
    %v498 = vld [vmem:[%s1 + $0x48] sm:$0xff]
    %v499 = vld [vmem:[%s1 + $0x50] sm:$0xff]
    %v500 = vld [vmem:[%s1 + $0x58] sm:$0xff]
    %v501 = vld [vmem:[%s1 + $0x60] sm:$0xff]
    %v502 = vld [vmem:[%s1 + $0x68] sm:$0xff]
    %v503 = vld [vmem:[%s1 + $0x70] sm:$0xff]
    %v504 = vld [vmem:[%s1 + $0x78] sm:$0xff]
    %v505 = vld [vmem:[%s1 + $0x80] sm:$0xff]
    %v506 = vld [vmem:[%s1 + $0x88] sm:$0xff]
    %v507 = vld [vmem:[%s1 + $0x90] sm:$0xff]
    %v508 = vld [vmem:[%s1 + $0x98] sm:$0xff]
    %v509 = vld [vmem:[%s1 + $0xa0] sm:$0xff]
    %v510 = vld [vmem:[%s1 + $0xa8] sm:$0xff]
    %v511 = vld [vmem:[%s1 + $0xb0] sm:$0xff]
    %v512 = vld [vmem:[%s1 + $0xb8] sm:$0xff]
    %v513 = vld [vmem:[%s1 + $0xc0] sm:$0xff]
    %v514 = vld [vmem:[%s1 + $0xc8] sm:$0xff]
    %v515 = vld [vmem:[%s1 + $0xd0] sm:$0xff]
    %v516 = vld [vmem:[%s1 + $0xd8] sm:$0xff]
    %v517 = vld [vmem:[%s1 + $0xe0] sm:$0xff]
    %v518 = vld [vmem:[%s1 + $0xe8] sm:$0xff]
    %v519 = vld [vmem:[%s1 + $0xf0] sm:$0xff]
    %v520 = vld [vmem:[%s1 + $0xf8] sm:$0xff]
    %v521 = vld [vmem:[%s1 + $0x100] sm:$0xff]
    %v522 = vld [vmem:[%s1 + $0x108] sm:$0xff]
    %v523 = vld [vmem:[%s1 + $0x110] sm:$0xff]
    %v524 = vld [vmem:[%s1 + $0x118] sm:$0xff]
    %v525 = vld [vmem:[%s1 + $0x120] sm:$0xff]
    %v526 = vld [vmem:[%s1 + $0x128] sm:$0xff]
    %v527 = vld [vmem:[%s1 + $0x130] sm:$0xff]
    %v528 = vld [vmem:[%s1 + $0x138] sm:$0xff]
    %v529 = vsel %vm98, %v489, 0.0
    %530 = vadd.xlane.f32.xlu0 %v529
    %v531 = vpop.xlane.xlu0 %530
    %v532 = vsel %vm98, %v490, 0.0
    %533 = vadd.xlane.f32.xlu0 %v532
    %v534 = vpop.xlane.xlu0 %533
    %v535 = vsel %vm98, %v491, 0.0
    %536 = vadd.xlane.f32.xlu0 %v535
    %v537 = vpop.xlane.xlu0 %536
    %v538 = vsel %vm98, %v492, 0.0
    %539 = vadd.xlane.f32.xlu0 %v538
    %v540 = vpop.xlane.xlu0 %539
    %v541 = vsel %vm98, %v493, 0.0
    %542 = vadd.xlane.f32.xlu0 %v541
    %v543 = vpop.xlane.xlu0 %542
    %v544 = vsel %vm98, %v494, 0.0
    %545 = vadd.xlane.f32.xlu0 %v544
    %v546 = vpop.xlane.xlu0 %545
    %v547 = vsel %vm98, %v495, 0.0
    %548 = vadd.xlane.f32.xlu0 %v547
    %v549 = vpop.xlane.xlu0 %548
    %v550 = vsel %vm98, %v496, 0.0
    %551 = vadd.xlane.f32.xlu0 %v550
    %v552 = vpop.xlane.xlu0 %551
    %v553 = vsel %vm98, %v497, 0.0
    %554 = vadd.xlane.f32.xlu0 %v553
    %v555 = vpop.xlane.xlu0 %554
    %v556 = vsel %vm98, %v498, 0.0
    %557 = vadd.xlane.f32.xlu0 %v556
    %v558 = vpop.xlane.xlu0 %557
    %v559 = vsel %vm98, %v499, 0.0
    %560 = vadd.xlane.f32.xlu0 %v559
    %v561 = vpop.xlane.xlu0 %560
    %v562 = vsel %vm98, %v500, 0.0
    %563 = vadd.xlane.f32.xlu0 %v562
    %v564 = vpop.xlane.xlu0 %563
    %v565 = vsel %vm98, %v501, 0.0
    %566 = vadd.xlane.f32.xlu0 %v565
    %v567 = vpop.xlane.xlu0 %566
    %v568 = vsel %vm98, %v502, 0.0
    %569 = vadd.xlane.f32.xlu0 %v568
    %v570 = vpop.xlane.xlu0 %569
    %v571 = vsel %vm98, %v503, 0.0
    %572 = vadd.xlane.f32.xlu0 %v571
    %v573 = vpop.xlane.xlu0 %572
    %v574 = vsel %vm98, %v504, 0.0
    %575 = vadd.xlane.f32.xlu0 %v574
    %v576 = vpop.xlane.xlu0 %575
    %v577 = vsel %vm98, %v505, 0.0
    %578 = vadd.xlane.f32.xlu0 %v577
    %v579 = vpop.xlane.xlu0 %578
    %v580 = vsel %vm98, %v506, 0.0
    %581 = vadd.xlane.f32.xlu0 %v580
    %v582 = vpop.xlane.xlu0 %581
    %v583 = vsel %vm98, %v507, 0.0
    %584 = vadd.xlane.f32.xlu0 %v583
    %v585 = vpop.xlane.xlu0 %584
    %v586 = vsel %vm98, %v508, 0.0
    %587 = vadd.xlane.f32.xlu0 %v586
    %v588 = vpop.xlane.xlu0 %587
    %v589 = vsel %vm98, %v509, 0.0
    %590 = vadd.xlane.f32.xlu0 %v589
    %v591 = vpop.xlane.xlu0 %590
    %v592 = vsel %vm98, %v510, 0.0
    %593 = vadd.xlane.f32.xlu0 %v592
    %v594 = vpop.xlane.xlu0 %593
    %v595 = vsel %vm98, %v511, 0.0
    %596 = vadd.xlane.f32.xlu0 %v595
    %v597 = vpop.xlane.xlu0 %596
    %v598 = vsel %vm98, %v512, 0.0
    %599 = vadd.xlane.f32.xlu0 %v598
    %v600 = vpop.xlane.xlu0 %599
    %v601 = vsel %vm98, %v513, 0.0
    %602 = vadd.xlane.f32.xlu0 %v601
    %v603 = vpop.xlane.xlu0 %602
    %v604 = vsel %vm98, %v514, 0.0
    %605 = vadd.xlane.f32.xlu0 %v604
    %v606 = vpop.xlane.xlu0 %605
    %v607 = vsel %vm98, %v515, 0.0
    %608 = vadd.xlane.f32.xlu0 %v607
    %v609 = vpop.xlane.xlu0 %608
    %v610 = vsel %vm98, %v516, 0.0
    %611 = vadd.xlane.f32.xlu0 %v610
    %v612 = vpop.xlane.xlu0 %611
    %v613 = vsel %vm98, %v517, 0.0
    %614 = vadd.xlane.f32.xlu0 %v613
    %v615 = vpop.xlane.xlu0 %614
    %v616 = vsel %vm98, %v518, 0.0
    %617 = vadd.xlane.f32.xlu0 %v616
    %v618 = vpop.xlane.xlu0 %617
    %v619 = vsel %vm98, %v519, 0.0
    %620 = vadd.xlane.f32.xlu0 %v619
    %v621 = vpop.xlane.xlu0 %620
    %v622 = vsel %vm98, %v520, 0.0
    %623 = vadd.xlane.f32.xlu0 %v622
    %v624 = vpop.xlane.xlu0 %623
    %v625 = vsel %vm98, %v521, 0.0
    %626 = vadd.xlane.f32.xlu0 %v625
    %v627 = vpop.xlane.xlu0 %626
    %v628 = vsel %vm98, %v522, 0.0
    %629 = vadd.xlane.f32.xlu0 %v628
    %v630 = vpop.xlane.xlu0 %629
    %v631 = vsel %vm98, %v523, 0.0
    %632 = vadd.xlane.f32.xlu0 %v631
    %v633 = vpop.xlane.xlu0 %632
    %v634 = vsel %vm98, %v524, 0.0
    %635 = vadd.xlane.f32.xlu0 %v634
    %v636 = vpop.xlane.xlu0 %635
    %v637 = vsel %vm98, %v525, 0.0
    %638 = vadd.xlane.f32.xlu0 %v637
    %v639 = vpop.xlane.xlu0 %638
    %v640 = vsel %vm98, %v526, 0.0
    %641 = vadd.xlane.f32.xlu0 %v640
    %v642 = vpop.xlane.xlu0 %641
    %v643 = vsel %vm98, %v527, 0.0
    %644 = vadd.xlane.f32.xlu0 %v643
    %v645 = vpop.xlane.xlu0 %644
    %v646 = vsel %vm98, %v528, 0.0
    %647 = vadd.xlane.f32.xlu0 %v646
    %v648 = vpop.xlane.xlu0 %647
    %v649 = vmul.f32 %v531, 0.015625
    %v650 = vmul.f32 %v534, 0.015625
    %v651 = vmul.f32 %v537, 0.015625
    %v652 = vmul.f32 %v540, 0.015625
    %v653 = vmul.f32 %v543, 0.015625
    %v654 = vmul.f32 %v546, 0.015625
    %v655 = vmul.f32 %v549, 0.015625
    %v656 = vmul.f32 %v552, 0.015625
    %v657 = vmul.f32 %v555, 0.015625
    %v658 = vmul.f32 %v558, 0.015625
    %v659 = vmul.f32 %v561, 0.015625
    %v660 = vmul.f32 %v564, 0.015625
    %v661 = vmul.f32 %v567, 0.015625
    %v662 = vmul.f32 %v570, 0.015625
    %v663 = vmul.f32 %v573, 0.015625
    %v664 = vmul.f32 %v576, 0.015625
    %v665 = vmul.f32 %v579, 0.015625
    %v666 = vmul.f32 %v582, 0.015625
    %v667 = vmul.f32 %v585, 0.015625
    %v668 = vmul.f32 %v588, 0.015625
    %v669 = vmul.f32 %v591, 0.015625
    %v670 = vmul.f32 %v594, 0.015625
    %v671 = vmul.f32 %v597, 0.015625
    %v672 = vmul.f32 %v600, 0.015625
    %v673 = vmul.f32 %v603, 0.015625
    %v674 = vmul.f32 %v606, 0.015625
    %v675 = vmul.f32 %v609, 0.015625
    %v676 = vmul.f32 %v612, 0.015625
    %v677 = vmul.f32 %v615, 0.015625
    %v678 = vmul.f32 %v618, 0.015625
    %v679 = vmul.f32 %v621, 0.015625
    %v680 = vmul.f32 %v624, 0.015625
    %v681 = vmul.f32 %v627, 0.015625
    %v682 = vmul.f32 %v630, 0.015625
    %v683 = vmul.f32 %v633, 0.015625
    %v684 = vmul.f32 %v636, 0.015625
    %v685 = vmul.f32 %v639, 0.015625
    %v686 = vmul.f32 %v642, 0.015625
    %v687 = vmul.f32 %v645, 0.015625
    %v688 = vmul.f32 %v648, 0.015625
    %v689 = vld [vmem:[%s6] sm:$0xff]
    %v690 = vld [vmem:[%s6 + $0x8] sm:$0xff]
    %v691 = vld [vmem:[%s6 + $0x10] sm:$0xff]
    %v692 = vld [vmem:[%s6 + $0x18] sm:$0xff]
    %v693 = vld [vmem:[%s6 + $0x20] sm:$0xff]
    %v694 = vld [vmem:[%s6 + $0x28] sm:$0xff]
    %v695 = vld [vmem:[%s6 + $0x30] sm:$0xff]
    %v696 = vld [vmem:[%s6 + $0x38] sm:$0xff]
    %v697 = vld [vmem:[%s6 + $0x40] sm:$0xff]
    %v698 = vld [vmem:[%s6 + $0x48] sm:$0xff]
    %v699 = vld [vmem:[%s6 + $0x50] sm:$0xff]
    %v700 = vld [vmem:[%s6 + $0x58] sm:$0xff]
    %v701 = vld [vmem:[%s6 + $0x60] sm:$0xff]
    %v702 = vld [vmem:[%s6 + $0x68] sm:$0xff]
    %v703 = vld [vmem:[%s6 + $0x70] sm:$0xff]
    %v704 = vld [vmem:[%s6 + $0x78] sm:$0xff]
    %v705 = vld [vmem:[%s6 + $0x80] sm:$0xff]
    %v706 = vld [vmem:[%s6 + $0x88] sm:$0xff]
    %v707 = vld [vmem:[%s6 + $0x90] sm:$0xff]
    %v708 = vld [vmem:[%s6 + $0x98] sm:$0xff]
    %v709 = vld [vmem:[%s7] sm:$0x1]
    %v711 = vperm.slane %v709, 0
    %v753 = vperm.slane %v649, %v324
    %v754 = vperm.slane %v650, %v326
    %v755 = vsel %vm328, %v754, %v753
    %v756 = vperm.slane %v651, %v330
    %v757 = vsel %vm332, %v756, %v755
    %v758 = vperm.slane %v652, %v334
    %v759 = vsel %vm336, %v758, %v757
    %v760 = vperm.slane %v653, %v338
    %v761 = vsel %vm340, %v760, %v759
    %v762 = vperm.slane %v654, %v342
    %v763 = vsel %vm344, %v762, %v761
    %v764 = vperm.slane %v655, %v346
    %v765 = vsel %vm348, %v764, %v763
    %v766 = vperm.slane %v656, %v350
    %v767 = vsel %vm352, %v766, %v765
    %v768 = vperm.slane %v657, %v354
    %v769 = vsel %vm356, %v768, %v767
    %v770 = vperm.slane %v658, %v358
    %v771 = vsel %vm360, %v770, %v769
    %v772 = vperm.slane %v659, %v362
    %v773 = vsel %vm364, %v772, %v771
    %v774 = vperm.slane %v660, %v366
    %v775 = vsel %vm368, %v774, %v773
    %v776 = vperm.slane %v661, %v370
    %v777 = vsel %vm372, %v776, %v775
    %v778 = vperm.slane %v662, %v374
    %v779 = vsel %vm376, %v778, %v777
    %v780 = vperm.slane %v663, %v378
    %v781 = vsel %vm380, %v780, %v779
    %v782 = vperm.slane %v664, %v382
    %v783 = vsel %vm384, %v782, %v781
    %v784 = vperm.slane %v665, %v324
    %v785 = vperm.slane %v666, %v326
    %v786 = vsel %vm328, %v785, %v784
    %v787 = vperm.slane %v667, %v330
    %v788 = vsel %vm332, %v787, %v786
    %v789 = vperm.slane %v668, %v334
    %v790 = vsel %vm336, %v789, %v788
    %v791 = vperm.slane %v669, %v324
    %v792 = vperm.slane %v670, %v326
    %v793 = vsel %vm328, %v792, %v791
    %v794 = vperm.slane %v671, %v330
    %v795 = vsel %vm332, %v794, %v793
    %v796 = vperm.slane %v672, %v334
    %v797 = vsel %vm336, %v796, %v795
    %v798 = vperm.slane %v673, %v338
    %v799 = vsel %vm340, %v798, %v797
    %v800 = vperm.slane %v674, %v342
    %v801 = vsel %vm344, %v800, %v799
    %v802 = vperm.slane %v675, %v346
    %v803 = vsel %vm348, %v802, %v801
    %v804 = vperm.slane %v676, %v350
    %v805 = vsel %vm352, %v804, %v803
    %v806 = vperm.slane %v677, %v354
    %v807 = vsel %vm356, %v806, %v805
    %v808 = vperm.slane %v678, %v358
    %v809 = vsel %vm360, %v808, %v807
    %v810 = vperm.slane %v679, %v362
    %v811 = vsel %vm364, %v810, %v809
    %v812 = vperm.slane %v680, %v366
    %v813 = vsel %vm368, %v812, %v811
    %v814 = vperm.slane %v681, %v370
    %v815 = vsel %vm372, %v814, %v813
    %v816 = vperm.slane %v682, %v374
    %v817 = vsel %vm376, %v816, %v815
    %v818 = vperm.slane %v683, %v378
    %v819 = vsel %vm380, %v818, %v817
    %v820 = vperm.slane %v684, %v382
    %v821 = vsel %vm384, %v820, %v819
    %v822 = vperm.slane %v685, %v324
    %v823 = vperm.slane %v686, %v326
    %v824 = vsel %vm328, %v823, %v822
    %v825 = vperm.slane %v687, %v330
    %v826 = vsel %vm332, %v825, %v824
    %v827 = vperm.slane %v688, %v334
    %v828 = vsel %vm336, %v827, %v826
    %v829 = vsel %vm431, %v821, %v783
    %v830 = vsel %vm431, %v828, %v790
    %v832 = vsel %vm435, %v830, 0
    %834 = vmatpush.msra.mxu0 %v704
    %835 = vmatpush.msra.mxu0 %v703
    %836 = vmatpush.msra.mxu0 %v702
    %837 = vmatpush.msra.mxu0 %v701
    %838 = vmatpush.msra.mxu0 %v700
    %839 = vmatpush.msra.mxu0 %v699
    %840 = vmatpush.msra.mxu0 %v698
    %841 = vmatpush.msra.mxu0 %v697
    %842 = vmatpush.msra.mxu0 %v696
    %843 = vmatpush.msra.mxu0 %v695
    %844 = vmatpush.msra.mxu0 %v694
    %845 = vmatpush.msra.mxu0 %v693
    %846 = vmatpush.msra.mxu0 %v692
    %847 = vmatpush.msra.mxu0 %v691
    %848 = vmatpush.msra.mxu0 %v690
    %849 = vmatpush.msra.mxu0 %v689
    %850 = vmatmul.f32.gmra.mxu0 %v829
    %v851 = vpop.f32.mrf.mxu0
    %v852 = vadd.f32 %v711, %v851
    %853 = vdwg.mxu0
    %854 = vmatpush.msra.mxu0 0.0
    %855 = vmatpush.msra.mxu0 0.0
    %856 = vmatpush.msra.mxu0 0.0
    %857 = vmatpush.msra.mxu0 0.0
    %858 = vmatpush.msra.mxu0 0.0
    %859 = vmatpush.msra.mxu0 0.0
    %860 = vmatpush.msra.mxu0 0.0
    %861 = vmatpush.msra.mxu0 0.0
    %862 = vmatpush.msra.mxu0 0.0
    %863 = vmatpush.msra.mxu0 0.0
    %864 = vmatpush.msra.mxu0 0.0
    %865 = vmatpush.msra.mxu0 0.0
    %866 = vmatpush.msra.mxu0 %v708
    %867 = vmatpush.msra.mxu0 %v707
    %868 = vmatpush.msra.mxu0 %v706
    %869 = vmatpush.msra.mxu0 %v705
    %870 = vmatmul.f32.gmra.mxu0 %v832
    %v871 = vpop.f32.mrf.mxu0
    %v872 = vadd.f32 %v852, %v871
    %873 = vdwg.mxu0
    %v874 = vmax.f32 %v872, 0.0
    %v875 = vld [vmem:[%s12 + $0x1] sm:$0x1]
    %v877 = vperm.slane %v875, 0
    %v879 = vmul.f32 %v874, %v877
    %v880 = vsel %vm484, %v879, 0.0
    %881 = vadd.xlane.f32.xlu0 %v880
    %v882 = vpop.xlane.xlu0 %881
    %v883 = vadd.f32 %v488, %v882
    %v884 = vld [vmem:[%s2] sm:$0xff]
    %v885 = vld [vmem:[%s2 + $0x8] sm:$0xff]
    %v886 = vld [vmem:[%s2 + $0x10] sm:$0xff]
    %v887 = vld [vmem:[%s2 + $0x18] sm:$0xff]
    %v888 = vld [vmem:[%s2 + $0x20] sm:$0xff]
    %v889 = vld [vmem:[%s2 + $0x28] sm:$0xff]
    %v890 = vld [vmem:[%s2 + $0x30] sm:$0xff]
    %v891 = vld [vmem:[%s2 + $0x38] sm:$0xff]
    %v892 = vld [vmem:[%s2 + $0x40] sm:$0xff]
    %v893 = vld [vmem:[%s2 + $0x48] sm:$0xff]
    %v894 = vld [vmem:[%s2 + $0x50] sm:$0xff]
    %v895 = vld [vmem:[%s2 + $0x58] sm:$0xff]
    %v896 = vld [vmem:[%s2 + $0x60] sm:$0xff]
    %v897 = vld [vmem:[%s2 + $0x68] sm:$0xff]
    %v898 = vld [vmem:[%s2 + $0x70] sm:$0xff]
    %v899 = vld [vmem:[%s2 + $0x78] sm:$0xff]
    %v900 = vld [vmem:[%s2 + $0x80] sm:$0xff]
    %v901 = vld [vmem:[%s2 + $0x88] sm:$0xff]
    %v902 = vld [vmem:[%s2 + $0x90] sm:$0xff]
    %v903 = vld [vmem:[%s2 + $0x98] sm:$0xff]
    %v904 = vld [vmem:[%s2 + $0xa0] sm:$0xff]
    %v905 = vld [vmem:[%s2 + $0xa8] sm:$0xff]
    %v906 = vld [vmem:[%s2 + $0xb0] sm:$0xff]
    %v907 = vld [vmem:[%s2 + $0xb8] sm:$0xff]
    %v908 = vld [vmem:[%s2 + $0xc0] sm:$0xff]
    %v909 = vld [vmem:[%s2 + $0xc8] sm:$0xff]
    %v910 = vld [vmem:[%s2 + $0xd0] sm:$0xff]
    %v911 = vld [vmem:[%s2 + $0xd8] sm:$0xff]
    %v912 = vld [vmem:[%s2 + $0xe0] sm:$0xff]
    %v913 = vld [vmem:[%s2 + $0xe8] sm:$0xff]
    %v914 = vld [vmem:[%s2 + $0xf0] sm:$0xff]
    %v915 = vld [vmem:[%s2 + $0xf8] sm:$0xff]
    %v916 = vld [vmem:[%s2 + $0x100] sm:$0xff]
    %v917 = vld [vmem:[%s2 + $0x108] sm:$0xff]
    %v918 = vld [vmem:[%s2 + $0x110] sm:$0xff]
    %v919 = vld [vmem:[%s2 + $0x118] sm:$0xff]
    %v920 = vld [vmem:[%s2 + $0x120] sm:$0xff]
    %v921 = vld [vmem:[%s2 + $0x128] sm:$0xff]
    %v922 = vld [vmem:[%s2 + $0x130] sm:$0xff]
    %v923 = vld [vmem:[%s2 + $0x138] sm:$0xff]
    %v924 = vsel %vm98, %v884, 0.0
    %925 = vadd.xlane.f32.xlu0 %v924
    %v926 = vpop.xlane.xlu0 %925
    %v927 = vsel %vm98, %v885, 0.0
    %928 = vadd.xlane.f32.xlu0 %v927
    %v929 = vpop.xlane.xlu0 %928
    %v930 = vsel %vm98, %v886, 0.0
    %931 = vadd.xlane.f32.xlu0 %v930
    %v932 = vpop.xlane.xlu0 %931
    %v933 = vsel %vm98, %v887, 0.0
    %934 = vadd.xlane.f32.xlu0 %v933
    %v935 = vpop.xlane.xlu0 %934
    %v936 = vsel %vm98, %v888, 0.0
    %937 = vadd.xlane.f32.xlu0 %v936
    %v938 = vpop.xlane.xlu0 %937
    %v939 = vsel %vm98, %v889, 0.0
    %940 = vadd.xlane.f32.xlu0 %v939
    %v941 = vpop.xlane.xlu0 %940
    %v942 = vsel %vm98, %v890, 0.0
    %943 = vadd.xlane.f32.xlu0 %v942
    %v944 = vpop.xlane.xlu0 %943
    %v945 = vsel %vm98, %v891, 0.0
    %946 = vadd.xlane.f32.xlu0 %v945
    %v947 = vpop.xlane.xlu0 %946
    %v948 = vsel %vm98, %v892, 0.0
    %949 = vadd.xlane.f32.xlu0 %v948
    %v950 = vpop.xlane.xlu0 %949
    %v951 = vsel %vm98, %v893, 0.0
    %952 = vadd.xlane.f32.xlu0 %v951
    %v953 = vpop.xlane.xlu0 %952
    %v954 = vsel %vm98, %v894, 0.0
    %955 = vadd.xlane.f32.xlu0 %v954
    %v956 = vpop.xlane.xlu0 %955
    %v957 = vsel %vm98, %v895, 0.0
    %958 = vadd.xlane.f32.xlu0 %v957
    %v959 = vpop.xlane.xlu0 %958
    %v960 = vsel %vm98, %v896, 0.0
    %961 = vadd.xlane.f32.xlu0 %v960
    %v962 = vpop.xlane.xlu0 %961
    %v963 = vsel %vm98, %v897, 0.0
    %964 = vadd.xlane.f32.xlu0 %v963
    %v965 = vpop.xlane.xlu0 %964
    %v966 = vsel %vm98, %v898, 0.0
    %967 = vadd.xlane.f32.xlu0 %v966
    %v968 = vpop.xlane.xlu0 %967
    %v969 = vsel %vm98, %v899, 0.0
    %970 = vadd.xlane.f32.xlu0 %v969
    %v971 = vpop.xlane.xlu0 %970
    %v972 = vsel %vm98, %v900, 0.0
    %973 = vadd.xlane.f32.xlu0 %v972
    %v974 = vpop.xlane.xlu0 %973
    %v975 = vsel %vm98, %v901, 0.0
    %976 = vadd.xlane.f32.xlu0 %v975
    %v977 = vpop.xlane.xlu0 %976
    %v978 = vsel %vm98, %v902, 0.0
    %979 = vadd.xlane.f32.xlu0 %v978
    %v980 = vpop.xlane.xlu0 %979
    %v981 = vsel %vm98, %v903, 0.0
    %982 = vadd.xlane.f32.xlu0 %v981
    %v983 = vpop.xlane.xlu0 %982
    %v984 = vsel %vm98, %v904, 0.0
    %985 = vadd.xlane.f32.xlu0 %v984
    %v986 = vpop.xlane.xlu0 %985
    %v987 = vsel %vm98, %v905, 0.0
    %988 = vadd.xlane.f32.xlu0 %v987
    %v989 = vpop.xlane.xlu0 %988
    %v990 = vsel %vm98, %v906, 0.0
    %991 = vadd.xlane.f32.xlu0 %v990
    %v992 = vpop.xlane.xlu0 %991
    %v993 = vsel %vm98, %v907, 0.0
    %994 = vadd.xlane.f32.xlu0 %v993
    %v995 = vpop.xlane.xlu0 %994
    %v996 = vsel %vm98, %v908, 0.0
    %997 = vadd.xlane.f32.xlu0 %v996
    %v998 = vpop.xlane.xlu0 %997
    %v999 = vsel %vm98, %v909, 0.0
    %1000 = vadd.xlane.f32.xlu0 %v999
    %v1001 = vpop.xlane.xlu0 %1000
    %v1002 = vsel %vm98, %v910, 0.0
    %1003 = vadd.xlane.f32.xlu0 %v1002
    %v1004 = vpop.xlane.xlu0 %1003
    %v1005 = vsel %vm98, %v911, 0.0
    %1006 = vadd.xlane.f32.xlu0 %v1005
    %v1007 = vpop.xlane.xlu0 %1006
    %v1008 = vsel %vm98, %v912, 0.0
    %1009 = vadd.xlane.f32.xlu0 %v1008
    %v1010 = vpop.xlane.xlu0 %1009
    %v1011 = vsel %vm98, %v913, 0.0
    %1012 = vadd.xlane.f32.xlu0 %v1011
    %v1013 = vpop.xlane.xlu0 %1012
    %v1014 = vsel %vm98, %v914, 0.0
    %1015 = vadd.xlane.f32.xlu0 %v1014
    %v1016 = vpop.xlane.xlu0 %1015
    %v1017 = vsel %vm98, %v915, 0.0
    %1018 = vadd.xlane.f32.xlu0 %v1017
    %v1019 = vpop.xlane.xlu0 %1018
    %v1020 = vsel %vm98, %v916, 0.0
    %1021 = vadd.xlane.f32.xlu0 %v1020
    %v1022 = vpop.xlane.xlu0 %1021
    %v1023 = vsel %vm98, %v917, 0.0
    %1024 = vadd.xlane.f32.xlu0 %v1023
    %v1025 = vpop.xlane.xlu0 %1024
    %v1026 = vsel %vm98, %v918, 0.0
    %1027 = vadd.xlane.f32.xlu0 %v1026
    %v1028 = vpop.xlane.xlu0 %1027
    %v1029 = vsel %vm98, %v919, 0.0
    %1030 = vadd.xlane.f32.xlu0 %v1029
    %v1031 = vpop.xlane.xlu0 %1030
    %v1032 = vsel %vm98, %v920, 0.0
    %1033 = vadd.xlane.f32.xlu0 %v1032
    %v1034 = vpop.xlane.xlu0 %1033
    %v1035 = vsel %vm98, %v921, 0.0
    %1036 = vadd.xlane.f32.xlu0 %v1035
    %v1037 = vpop.xlane.xlu0 %1036
    %v1038 = vsel %vm98, %v922, 0.0
    %1039 = vadd.xlane.f32.xlu0 %v1038
    %v1040 = vpop.xlane.xlu0 %1039
    %v1041 = vsel %vm98, %v923, 0.0
    %1042 = vadd.xlane.f32.xlu0 %v1041
    %v1043 = vpop.xlane.xlu0 %1042
    %v1044 = vmul.f32 %v926, 0.015625
    %v1045 = vmul.f32 %v929, 0.015625
    %v1046 = vmul.f32 %v932, 0.015625
    %v1047 = vmul.f32 %v935, 0.015625
    %v1048 = vmul.f32 %v938, 0.015625
    %v1049 = vmul.f32 %v941, 0.015625
    %v1050 = vmul.f32 %v944, 0.015625
    %v1051 = vmul.f32 %v947, 0.015625
    %v1052 = vmul.f32 %v950, 0.015625
    %v1053 = vmul.f32 %v953, 0.015625
    %v1054 = vmul.f32 %v956, 0.015625
    %v1055 = vmul.f32 %v959, 0.015625
    %v1056 = vmul.f32 %v962, 0.015625
    %v1057 = vmul.f32 %v965, 0.015625
    %v1058 = vmul.f32 %v968, 0.015625
    %v1059 = vmul.f32 %v971, 0.015625
    %v1060 = vmul.f32 %v974, 0.015625
    %v1061 = vmul.f32 %v977, 0.015625
    %v1062 = vmul.f32 %v980, 0.015625
    %v1063 = vmul.f32 %v983, 0.015625
    %v1064 = vmul.f32 %v986, 0.015625
    %v1065 = vmul.f32 %v989, 0.015625
    %v1066 = vmul.f32 %v992, 0.015625
    %v1067 = vmul.f32 %v995, 0.015625
    %v1068 = vmul.f32 %v998, 0.015625
    %v1069 = vmul.f32 %v1001, 0.015625
    %v1070 = vmul.f32 %v1004, 0.015625
    %v1071 = vmul.f32 %v1007, 0.015625
    %v1072 = vmul.f32 %v1010, 0.015625
    %v1073 = vmul.f32 %v1013, 0.015625
    %v1074 = vmul.f32 %v1016, 0.015625
    %v1075 = vmul.f32 %v1019, 0.015625
    %v1076 = vmul.f32 %v1022, 0.015625
    %v1077 = vmul.f32 %v1025, 0.015625
    %v1078 = vmul.f32 %v1028, 0.015625
    %v1079 = vmul.f32 %v1031, 0.015625
    %v1080 = vmul.f32 %v1034, 0.015625
    %v1081 = vmul.f32 %v1037, 0.015625
    %v1082 = vmul.f32 %v1040, 0.015625
    %v1083 = vmul.f32 %v1043, 0.015625
    %v1084 = vld [vmem:[%s8] sm:$0xff]
    %v1085 = vld [vmem:[%s8 + $0x8] sm:$0xff]
    %v1086 = vld [vmem:[%s8 + $0x10] sm:$0xff]
    %v1087 = vld [vmem:[%s8 + $0x18] sm:$0xff]
    %v1088 = vld [vmem:[%s8 + $0x20] sm:$0xff]
    %v1089 = vld [vmem:[%s8 + $0x28] sm:$0xff]
    %v1090 = vld [vmem:[%s8 + $0x30] sm:$0xff]
    %v1091 = vld [vmem:[%s8 + $0x38] sm:$0xff]
    %v1092 = vld [vmem:[%s8 + $0x40] sm:$0xff]
    %v1093 = vld [vmem:[%s8 + $0x48] sm:$0xff]
    %v1094 = vld [vmem:[%s8 + $0x50] sm:$0xff]
    %v1095 = vld [vmem:[%s8 + $0x58] sm:$0xff]
    %v1096 = vld [vmem:[%s8 + $0x60] sm:$0xff]
    %v1097 = vld [vmem:[%s8 + $0x68] sm:$0xff]
    %v1098 = vld [vmem:[%s8 + $0x70] sm:$0xff]
    %v1099 = vld [vmem:[%s8 + $0x78] sm:$0xff]
    %v1100 = vld [vmem:[%s8 + $0x80] sm:$0xff]
    %v1101 = vld [vmem:[%s8 + $0x88] sm:$0xff]
    %v1102 = vld [vmem:[%s8 + $0x90] sm:$0xff]
    %v1103 = vld [vmem:[%s8 + $0x98] sm:$0xff]
    %v1104 = vld [vmem:[%s9] sm:$0x1]
    %v1106 = vperm.slane %v1104, 0
    %v1148 = vperm.slane %v1044, %v324
    %v1149 = vperm.slane %v1045, %v326
    %v1150 = vsel %vm328, %v1149, %v1148
    %v1151 = vperm.slane %v1046, %v330
    %v1152 = vsel %vm332, %v1151, %v1150
    %v1153 = vperm.slane %v1047, %v334
    %v1154 = vsel %vm336, %v1153, %v1152
    %v1155 = vperm.slane %v1048, %v338
    %v1156 = vsel %vm340, %v1155, %v1154
    %v1157 = vperm.slane %v1049, %v342
    %v1158 = vsel %vm344, %v1157, %v1156
    %v1159 = vperm.slane %v1050, %v346
    %v1160 = vsel %vm348, %v1159, %v1158
    %v1161 = vperm.slane %v1051, %v350
    %v1162 = vsel %vm352, %v1161, %v1160
    %v1163 = vperm.slane %v1052, %v354
    %v1164 = vsel %vm356, %v1163, %v1162
    %v1165 = vperm.slane %v1053, %v358
    %v1166 = vsel %vm360, %v1165, %v1164
    %v1167 = vperm.slane %v1054, %v362
    %v1168 = vsel %vm364, %v1167, %v1166
    %v1169 = vperm.slane %v1055, %v366
    %v1170 = vsel %vm368, %v1169, %v1168
    %v1171 = vperm.slane %v1056, %v370
    %v1172 = vsel %vm372, %v1171, %v1170
    %v1173 = vperm.slane %v1057, %v374
    %v1174 = vsel %vm376, %v1173, %v1172
    %v1175 = vperm.slane %v1058, %v378
    %v1176 = vsel %vm380, %v1175, %v1174
    %v1177 = vperm.slane %v1059, %v382
    %v1178 = vsel %vm384, %v1177, %v1176
    %v1179 = vperm.slane %v1060, %v324
    %v1180 = vperm.slane %v1061, %v326
    %v1181 = vsel %vm328, %v1180, %v1179
    %v1182 = vperm.slane %v1062, %v330
    %v1183 = vsel %vm332, %v1182, %v1181
    %v1184 = vperm.slane %v1063, %v334
    %v1185 = vsel %vm336, %v1184, %v1183
    %v1186 = vperm.slane %v1064, %v324
    %v1187 = vperm.slane %v1065, %v326
    %v1188 = vsel %vm328, %v1187, %v1186
    %v1189 = vperm.slane %v1066, %v330
    %v1190 = vsel %vm332, %v1189, %v1188
    %v1191 = vperm.slane %v1067, %v334
    %v1192 = vsel %vm336, %v1191, %v1190
    %v1193 = vperm.slane %v1068, %v338
    %v1194 = vsel %vm340, %v1193, %v1192
    %v1195 = vperm.slane %v1069, %v342
    %v1196 = vsel %vm344, %v1195, %v1194
    %v1197 = vperm.slane %v1070, %v346
    %v1198 = vsel %vm348, %v1197, %v1196
    %v1199 = vperm.slane %v1071, %v350
    %v1200 = vsel %vm352, %v1199, %v1198
    %v1201 = vperm.slane %v1072, %v354
    %v1202 = vsel %vm356, %v1201, %v1200
    %v1203 = vperm.slane %v1073, %v358
    %v1204 = vsel %vm360, %v1203, %v1202
    %v1205 = vperm.slane %v1074, %v362
    %v1206 = vsel %vm364, %v1205, %v1204
    %v1207 = vperm.slane %v1075, %v366
    %v1208 = vsel %vm368, %v1207, %v1206
    %v1209 = vperm.slane %v1076, %v370
    %v1210 = vsel %vm372, %v1209, %v1208
    %v1211 = vperm.slane %v1077, %v374
    %v1212 = vsel %vm376, %v1211, %v1210
    %v1213 = vperm.slane %v1078, %v378
    %v1214 = vsel %vm380, %v1213, %v1212
    %v1215 = vperm.slane %v1079, %v382
    %v1216 = vsel %vm384, %v1215, %v1214
    %v1217 = vperm.slane %v1080, %v324
    %v1218 = vperm.slane %v1081, %v326
    %v1219 = vsel %vm328, %v1218, %v1217
    %v1220 = vperm.slane %v1082, %v330
    %v1221 = vsel %vm332, %v1220, %v1219
    %v1222 = vperm.slane %v1083, %v334
    %v1223 = vsel %vm336, %v1222, %v1221
    %v1224 = vsel %vm431, %v1216, %v1178
    %v1225 = vsel %vm431, %v1223, %v1185
    %v1227 = vsel %vm435, %v1225, 0
    %1229 = vmatpush.msra.mxu0 %v1099
    %1230 = vmatpush.msra.mxu0 %v1098
    %1231 = vmatpush.msra.mxu0 %v1097
    %1232 = vmatpush.msra.mxu0 %v1096
    %1233 = vmatpush.msra.mxu0 %v1095
    %1234 = vmatpush.msra.mxu0 %v1094
    %1235 = vmatpush.msra.mxu0 %v1093
    %1236 = vmatpush.msra.mxu0 %v1092
    %1237 = vmatpush.msra.mxu0 %v1091
    %1238 = vmatpush.msra.mxu0 %v1090
    %1239 = vmatpush.msra.mxu0 %v1089
    %1240 = vmatpush.msra.mxu0 %v1088
    %1241 = vmatpush.msra.mxu0 %v1087
    %1242 = vmatpush.msra.mxu0 %v1086
    %1243 = vmatpush.msra.mxu0 %v1085
    %1244 = vmatpush.msra.mxu0 %v1084
    %1245 = vmatmul.f32.gmra.mxu0 %v1224
    %v1246 = vpop.f32.mrf.mxu0
    %v1247 = vadd.f32 %v1106, %v1246
    %1248 = vdwg.mxu0
    %1249 = vmatpush.msra.mxu0 0.0
    %1250 = vmatpush.msra.mxu0 0.0
    %1251 = vmatpush.msra.mxu0 0.0
    %1252 = vmatpush.msra.mxu0 0.0
    %1253 = vmatpush.msra.mxu0 0.0
    %1254 = vmatpush.msra.mxu0 0.0
    %1255 = vmatpush.msra.mxu0 0.0
    %1256 = vmatpush.msra.mxu0 0.0
    %1257 = vmatpush.msra.mxu0 0.0
    %1258 = vmatpush.msra.mxu0 0.0
    %1259 = vmatpush.msra.mxu0 0.0
    %1260 = vmatpush.msra.mxu0 0.0
    %1261 = vmatpush.msra.mxu0 %v1103
    %1262 = vmatpush.msra.mxu0 %v1102
    %1263 = vmatpush.msra.mxu0 %v1101
    %1264 = vmatpush.msra.mxu0 %v1100
    %1265 = vmatmul.f32.gmra.mxu0 %v1227
    %v1266 = vpop.f32.mrf.mxu0
    %v1267 = vadd.f32 %v1247, %v1266
    %1268 = vdwg.mxu0
    %v1269 = vmax.f32 %v1267, 0.0
    %v1270 = vld [vmem:[%s12 + $0x2] sm:$0x1]
    %v1272 = vperm.slane %v1270, 0
    %v1274 = vmul.f32 %v1269, %v1272
    %v1275 = vsel %vm484, %v1274, 0.0
    %1276 = vadd.xlane.f32.xlu0 %v1275
    %v1277 = vpop.xlane.xlu0 %1276
    %v1278 = vadd.f32 %v883, %v1277
    %v1279 = vld [vmem:[%s3] sm:$0xff]
    %v1280 = vld [vmem:[%s3 + $0x8] sm:$0xff]
    %v1281 = vld [vmem:[%s3 + $0x10] sm:$0xff]
    %v1282 = vld [vmem:[%s3 + $0x18] sm:$0xff]
    %v1283 = vld [vmem:[%s3 + $0x20] sm:$0xff]
    %v1284 = vld [vmem:[%s3 + $0x28] sm:$0xff]
    %v1285 = vld [vmem:[%s3 + $0x30] sm:$0xff]
    %v1286 = vld [vmem:[%s3 + $0x38] sm:$0xff]
    %v1287 = vld [vmem:[%s3 + $0x40] sm:$0xff]
    %v1288 = vld [vmem:[%s3 + $0x48] sm:$0xff]
    %v1289 = vld [vmem:[%s3 + $0x50] sm:$0xff]
    %v1290 = vld [vmem:[%s3 + $0x58] sm:$0xff]
    %v1291 = vld [vmem:[%s3 + $0x60] sm:$0xff]
    %v1292 = vld [vmem:[%s3 + $0x68] sm:$0xff]
    %v1293 = vld [vmem:[%s3 + $0x70] sm:$0xff]
    %v1294 = vld [vmem:[%s3 + $0x78] sm:$0xff]
    %v1295 = vld [vmem:[%s3 + $0x80] sm:$0xff]
    %v1296 = vld [vmem:[%s3 + $0x88] sm:$0xff]
    %v1297 = vld [vmem:[%s3 + $0x90] sm:$0xff]
    %v1298 = vld [vmem:[%s3 + $0x98] sm:$0xff]
    %v1299 = vld [vmem:[%s3 + $0xa0] sm:$0xff]
    %v1300 = vld [vmem:[%s3 + $0xa8] sm:$0xff]
    %v1301 = vld [vmem:[%s3 + $0xb0] sm:$0xff]
    %v1302 = vld [vmem:[%s3 + $0xb8] sm:$0xff]
    %v1303 = vld [vmem:[%s3 + $0xc0] sm:$0xff]
    %v1304 = vld [vmem:[%s3 + $0xc8] sm:$0xff]
    %v1305 = vld [vmem:[%s3 + $0xd0] sm:$0xff]
    %v1306 = vld [vmem:[%s3 + $0xd8] sm:$0xff]
    %v1307 = vld [vmem:[%s3 + $0xe0] sm:$0xff]
    %v1308 = vld [vmem:[%s3 + $0xe8] sm:$0xff]
    %v1309 = vld [vmem:[%s3 + $0xf0] sm:$0xff]
    %v1310 = vld [vmem:[%s3 + $0xf8] sm:$0xff]
    %v1311 = vld [vmem:[%s3 + $0x100] sm:$0xff]
    %v1312 = vld [vmem:[%s3 + $0x108] sm:$0xff]
    %v1313 = vld [vmem:[%s3 + $0x110] sm:$0xff]
    %v1314 = vld [vmem:[%s3 + $0x118] sm:$0xff]
    %v1315 = vld [vmem:[%s3 + $0x120] sm:$0xff]
    %v1316 = vld [vmem:[%s3 + $0x128] sm:$0xff]
    %v1317 = vld [vmem:[%s3 + $0x130] sm:$0xff]
    %v1318 = vld [vmem:[%s3 + $0x138] sm:$0xff]
    %v1319 = vld [vmem:[%s3 + $0x140] sm:$0xff]
    %v1320 = vld [vmem:[%s3 + $0x148] sm:$0xff]
    %v1321 = vld [vmem:[%s3 + $0x150] sm:$0xff]
    %v1322 = vld [vmem:[%s3 + $0x158] sm:$0xff]
    %v1323 = vld [vmem:[%s3 + $0x160] sm:$0xff]
    %v1324 = vld [vmem:[%s3 + $0x168] sm:$0xff]
    %v1325 = vld [vmem:[%s3 + $0x170] sm:$0xff]
    %v1326 = vld [vmem:[%s3 + $0x178] sm:$0xff]
    %v1327 = vld [vmem:[%s3 + $0x180] sm:$0xff]
    %v1328 = vld [vmem:[%s3 + $0x188] sm:$0xff]
    %v1329 = vld [vmem:[%s3 + $0x190] sm:$0xff]
    %v1330 = vld [vmem:[%s3 + $0x198] sm:$0xff]
    %v1331 = vld [vmem:[%s3 + $0x1a0] sm:$0xff]
    %v1332 = vld [vmem:[%s3 + $0x1a8] sm:$0xff]
    %v1333 = vld [vmem:[%s3 + $0x1b0] sm:$0xff]
    %v1334 = vld [vmem:[%s3 + $0x1b8] sm:$0xff]
    %v1335 = vld [vmem:[%s3 + $0x1c0] sm:$0xff]
    %v1336 = vld [vmem:[%s3 + $0x1c8] sm:$0xff]
    %v1337 = vld [vmem:[%s3 + $0x1d0] sm:$0xff]
    %v1338 = vld [vmem:[%s3 + $0x1d8] sm:$0xff]
    %v1339 = vld [vmem:[%s3 + $0x1e0] sm:$0xff]
    %v1340 = vld [vmem:[%s3 + $0x1e8] sm:$0xff]
    %v1341 = vld [vmem:[%s3 + $0x1f0] sm:$0xff]
    %v1342 = vld [vmem:[%s3 + $0x1f8] sm:$0xff]
    %v1343 = vld [vmem:[%s3 + $0x200] sm:$0xff]
    %v1344 = vld [vmem:[%s3 + $0x208] sm:$0xff]
    %v1345 = vld [vmem:[%s3 + $0x210] sm:$0xff]
    %v1346 = vld [vmem:[%s3 + $0x218] sm:$0xff]
    %v1347 = vld [vmem:[%s3 + $0x220] sm:$0xff]
    %v1348 = vld [vmem:[%s3 + $0x228] sm:$0xff]
    %v1349 = vld [vmem:[%s3 + $0x230] sm:$0xff]
    %v1350 = vld [vmem:[%s3 + $0x238] sm:$0xff]
    %v1351 = vld [vmem:[%s3 + $0x240] sm:$0xff]
    %v1352 = vld [vmem:[%s3 + $0x248] sm:$0xff]
    %v1353 = vld [vmem:[%s3 + $0x250] sm:$0xff]
    %v1354 = vld [vmem:[%s3 + $0x258] sm:$0xff]
    %v1355 = vld [vmem:[%s3 + $0x260] sm:$0xff]
    %v1356 = vld [vmem:[%s3 + $0x268] sm:$0xff]
    %v1357 = vld [vmem:[%s3 + $0x270] sm:$0xff]
    %v1358 = vld [vmem:[%s3 + $0x278] sm:$0xff]
    %v1359 = vsel %vm98, %v1279, 0.0
    %1360 = vadd.xlane.f32.xlu0 %v1359
    %v1361 = vpop.xlane.xlu0 %1360
    %v1362 = vsel %vm98, %v1280, 0.0
    %1363 = vadd.xlane.f32.xlu0 %v1362
    %v1364 = vpop.xlane.xlu0 %1363
    %v1365 = vsel %vm98, %v1281, 0.0
    %1366 = vadd.xlane.f32.xlu0 %v1365
    %v1367 = vpop.xlane.xlu0 %1366
    %v1368 = vsel %vm98, %v1282, 0.0
    %1369 = vadd.xlane.f32.xlu0 %v1368
    %v1370 = vpop.xlane.xlu0 %1369
    %v1371 = vsel %vm98, %v1283, 0.0
    %1372 = vadd.xlane.f32.xlu0 %v1371
    %v1373 = vpop.xlane.xlu0 %1372
    %v1374 = vsel %vm98, %v1284, 0.0
    %1375 = vadd.xlane.f32.xlu0 %v1374
    %v1376 = vpop.xlane.xlu0 %1375
    %v1377 = vsel %vm98, %v1285, 0.0
    %1378 = vadd.xlane.f32.xlu0 %v1377
    %v1379 = vpop.xlane.xlu0 %1378
    %v1380 = vsel %vm98, %v1286, 0.0
    %1381 = vadd.xlane.f32.xlu0 %v1380
    %v1382 = vpop.xlane.xlu0 %1381
    %v1383 = vsel %vm98, %v1287, 0.0
    %1384 = vadd.xlane.f32.xlu0 %v1383
    %v1385 = vpop.xlane.xlu0 %1384
    %v1386 = vsel %vm98, %v1288, 0.0
    %1387 = vadd.xlane.f32.xlu0 %v1386
    %v1388 = vpop.xlane.xlu0 %1387
    %v1389 = vsel %vm98, %v1289, 0.0
    %1390 = vadd.xlane.f32.xlu0 %v1389
    %v1391 = vpop.xlane.xlu0 %1390
    %v1392 = vsel %vm98, %v1290, 0.0
    %1393 = vadd.xlane.f32.xlu0 %v1392
    %v1394 = vpop.xlane.xlu0 %1393
    %v1395 = vsel %vm98, %v1291, 0.0
    %1396 = vadd.xlane.f32.xlu0 %v1395
    %v1397 = vpop.xlane.xlu0 %1396
    %v1398 = vsel %vm98, %v1292, 0.0
    %1399 = vadd.xlane.f32.xlu0 %v1398
    %v1400 = vpop.xlane.xlu0 %1399
    %v1401 = vsel %vm98, %v1293, 0.0
    %1402 = vadd.xlane.f32.xlu0 %v1401
    %v1403 = vpop.xlane.xlu0 %1402
    %v1404 = vsel %vm98, %v1294, 0.0
    %1405 = vadd.xlane.f32.xlu0 %v1404
    %v1406 = vpop.xlane.xlu0 %1405
    %v1407 = vsel %vm98, %v1295, 0.0
    %1408 = vadd.xlane.f32.xlu0 %v1407
    %v1409 = vpop.xlane.xlu0 %1408
    %v1410 = vsel %vm98, %v1296, 0.0
    %1411 = vadd.xlane.f32.xlu0 %v1410
    %v1412 = vpop.xlane.xlu0 %1411
    %v1413 = vsel %vm98, %v1297, 0.0
    %1414 = vadd.xlane.f32.xlu0 %v1413
    %v1415 = vpop.xlane.xlu0 %1414
    %v1416 = vsel %vm98, %v1298, 0.0
    %1417 = vadd.xlane.f32.xlu0 %v1416
    %v1418 = vpop.xlane.xlu0 %1417
    %v1419 = vsel %vm98, %v1299, 0.0
    %1420 = vadd.xlane.f32.xlu0 %v1419
    %v1421 = vpop.xlane.xlu0 %1420
    %v1422 = vsel %vm98, %v1300, 0.0
    %1423 = vadd.xlane.f32.xlu0 %v1422
    %v1424 = vpop.xlane.xlu0 %1423
    %v1425 = vsel %vm98, %v1301, 0.0
    %1426 = vadd.xlane.f32.xlu0 %v1425
    %v1427 = vpop.xlane.xlu0 %1426
    %v1428 = vsel %vm98, %v1302, 0.0
    %1429 = vadd.xlane.f32.xlu0 %v1428
    %v1430 = vpop.xlane.xlu0 %1429
    %v1431 = vsel %vm98, %v1303, 0.0
    %1432 = vadd.xlane.f32.xlu0 %v1431
    %v1433 = vpop.xlane.xlu0 %1432
    %v1434 = vsel %vm98, %v1304, 0.0
    %1435 = vadd.xlane.f32.xlu0 %v1434
    %v1436 = vpop.xlane.xlu0 %1435
    %v1437 = vsel %vm98, %v1305, 0.0
    %1438 = vadd.xlane.f32.xlu0 %v1437
    %v1439 = vpop.xlane.xlu0 %1438
    %v1440 = vsel %vm98, %v1306, 0.0
    %1441 = vadd.xlane.f32.xlu0 %v1440
    %v1442 = vpop.xlane.xlu0 %1441
    %v1443 = vsel %vm98, %v1307, 0.0
    %1444 = vadd.xlane.f32.xlu0 %v1443
    %v1445 = vpop.xlane.xlu0 %1444
    %v1446 = vsel %vm98, %v1308, 0.0
    %1447 = vadd.xlane.f32.xlu0 %v1446
    %v1448 = vpop.xlane.xlu0 %1447
    %v1449 = vsel %vm98, %v1309, 0.0
    %1450 = vadd.xlane.f32.xlu0 %v1449
    %v1451 = vpop.xlane.xlu0 %1450
    %v1452 = vsel %vm98, %v1310, 0.0
    %1453 = vadd.xlane.f32.xlu0 %v1452
    %v1454 = vpop.xlane.xlu0 %1453
    %v1455 = vsel %vm98, %v1311, 0.0
    %1456 = vadd.xlane.f32.xlu0 %v1455
    %v1457 = vpop.xlane.xlu0 %1456
    %v1458 = vsel %vm98, %v1312, 0.0
    %1459 = vadd.xlane.f32.xlu0 %v1458
    %v1460 = vpop.xlane.xlu0 %1459
    %v1461 = vsel %vm98, %v1313, 0.0
    %1462 = vadd.xlane.f32.xlu0 %v1461
    %v1463 = vpop.xlane.xlu0 %1462
    %v1464 = vsel %vm98, %v1314, 0.0
    %1465 = vadd.xlane.f32.xlu0 %v1464
    %v1466 = vpop.xlane.xlu0 %1465
    %v1467 = vsel %vm98, %v1315, 0.0
    %1468 = vadd.xlane.f32.xlu0 %v1467
    %v1469 = vpop.xlane.xlu0 %1468
    %v1470 = vsel %vm98, %v1316, 0.0
    %1471 = vadd.xlane.f32.xlu0 %v1470
    %v1472 = vpop.xlane.xlu0 %1471
    %v1473 = vsel %vm98, %v1317, 0.0
    %1474 = vadd.xlane.f32.xlu0 %v1473
    %v1475 = vpop.xlane.xlu0 %1474
    %v1476 = vsel %vm98, %v1318, 0.0
    %1477 = vadd.xlane.f32.xlu0 %v1476
    %v1478 = vpop.xlane.xlu0 %1477
    %v1479 = vsel %vm98, %v1319, 0.0
    %1480 = vadd.xlane.f32.xlu0 %v1479
    %v1481 = vpop.xlane.xlu0 %1480
    %v1482 = vsel %vm98, %v1320, 0.0
    %1483 = vadd.xlane.f32.xlu0 %v1482
    %v1484 = vpop.xlane.xlu0 %1483
    %v1485 = vsel %vm98, %v1321, 0.0
    %1486 = vadd.xlane.f32.xlu0 %v1485
    %v1487 = vpop.xlane.xlu0 %1486
    %v1488 = vsel %vm98, %v1322, 0.0
    %1489 = vadd.xlane.f32.xlu0 %v1488
    %v1490 = vpop.xlane.xlu0 %1489
    %v1491 = vsel %vm98, %v1323, 0.0
    %1492 = vadd.xlane.f32.xlu0 %v1491
    %v1493 = vpop.xlane.xlu0 %1492
    %v1494 = vsel %vm98, %v1324, 0.0
    %1495 = vadd.xlane.f32.xlu0 %v1494
    %v1496 = vpop.xlane.xlu0 %1495
    %v1497 = vsel %vm98, %v1325, 0.0
    %1498 = vadd.xlane.f32.xlu0 %v1497
    %v1499 = vpop.xlane.xlu0 %1498
    %v1500 = vsel %vm98, %v1326, 0.0
    %1501 = vadd.xlane.f32.xlu0 %v1500
    %v1502 = vpop.xlane.xlu0 %1501
    %v1503 = vsel %vm98, %v1327, 0.0
    %1504 = vadd.xlane.f32.xlu0 %v1503
    %v1505 = vpop.xlane.xlu0 %1504
    %v1506 = vsel %vm98, %v1328, 0.0
    %1507 = vadd.xlane.f32.xlu0 %v1506
    %v1508 = vpop.xlane.xlu0 %1507
    %v1509 = vsel %vm98, %v1329, 0.0
    %1510 = vadd.xlane.f32.xlu0 %v1509
    %v1511 = vpop.xlane.xlu0 %1510
    %v1512 = vsel %vm98, %v1330, 0.0
    %1513 = vadd.xlane.f32.xlu0 %v1512
    %v1514 = vpop.xlane.xlu0 %1513
    %v1515 = vsel %vm98, %v1331, 0.0
    %1516 = vadd.xlane.f32.xlu0 %v1515
    %v1517 = vpop.xlane.xlu0 %1516
    %v1518 = vsel %vm98, %v1332, 0.0
    %1519 = vadd.xlane.f32.xlu0 %v1518
    %v1520 = vpop.xlane.xlu0 %1519
    %v1521 = vsel %vm98, %v1333, 0.0
    %1522 = vadd.xlane.f32.xlu0 %v1521
    %v1523 = vpop.xlane.xlu0 %1522
    %v1524 = vsel %vm98, %v1334, 0.0
    %1525 = vadd.xlane.f32.xlu0 %v1524
    %v1526 = vpop.xlane.xlu0 %1525
    %v1527 = vsel %vm98, %v1335, 0.0
    %1528 = vadd.xlane.f32.xlu0 %v1527
    %v1529 = vpop.xlane.xlu0 %1528
    %v1530 = vsel %vm98, %v1336, 0.0
    %1531 = vadd.xlane.f32.xlu0 %v1530
    %v1532 = vpop.xlane.xlu0 %1531
    %v1533 = vsel %vm98, %v1337, 0.0
    %1534 = vadd.xlane.f32.xlu0 %v1533
    %v1535 = vpop.xlane.xlu0 %1534
    %v1536 = vsel %vm98, %v1338, 0.0
    %1537 = vadd.xlane.f32.xlu0 %v1536
    %v1538 = vpop.xlane.xlu0 %1537
    %v1539 = vsel %vm98, %v1339, 0.0
    %1540 = vadd.xlane.f32.xlu0 %v1539
    %v1541 = vpop.xlane.xlu0 %1540
    %v1542 = vsel %vm98, %v1340, 0.0
    %1543 = vadd.xlane.f32.xlu0 %v1542
    %v1544 = vpop.xlane.xlu0 %1543
    %v1545 = vsel %vm98, %v1341, 0.0
    %1546 = vadd.xlane.f32.xlu0 %v1545
    %v1547 = vpop.xlane.xlu0 %1546
    %v1548 = vsel %vm98, %v1342, 0.0
    %1549 = vadd.xlane.f32.xlu0 %v1548
    %v1550 = vpop.xlane.xlu0 %1549
    %v1551 = vsel %vm98, %v1343, 0.0
    %1552 = vadd.xlane.f32.xlu0 %v1551
    %v1553 = vpop.xlane.xlu0 %1552
    %v1554 = vsel %vm98, %v1344, 0.0
    %1555 = vadd.xlane.f32.xlu0 %v1554
    %v1556 = vpop.xlane.xlu0 %1555
    %v1557 = vsel %vm98, %v1345, 0.0
    %1558 = vadd.xlane.f32.xlu0 %v1557
    %v1559 = vpop.xlane.xlu0 %1558
    %v1560 = vsel %vm98, %v1346, 0.0
    %1561 = vadd.xlane.f32.xlu0 %v1560
    %v1562 = vpop.xlane.xlu0 %1561
    %v1563 = vsel %vm98, %v1347, 0.0
    %1564 = vadd.xlane.f32.xlu0 %v1563
    %v1565 = vpop.xlane.xlu0 %1564
    %v1566 = vsel %vm98, %v1348, 0.0
    %1567 = vadd.xlane.f32.xlu0 %v1566
    %v1568 = vpop.xlane.xlu0 %1567
    %v1569 = vsel %vm98, %v1349, 0.0
    %1570 = vadd.xlane.f32.xlu0 %v1569
    %v1571 = vpop.xlane.xlu0 %1570
    %v1572 = vsel %vm98, %v1350, 0.0
    %1573 = vadd.xlane.f32.xlu0 %v1572
    %v1574 = vpop.xlane.xlu0 %1573
    %v1575 = vsel %vm98, %v1351, 0.0
    %1576 = vadd.xlane.f32.xlu0 %v1575
    %v1577 = vpop.xlane.xlu0 %1576
    %v1578 = vsel %vm98, %v1352, 0.0
    %1579 = vadd.xlane.f32.xlu0 %v1578
    %v1580 = vpop.xlane.xlu0 %1579
    %v1581 = vsel %vm98, %v1353, 0.0
    %1582 = vadd.xlane.f32.xlu0 %v1581
    %v1583 = vpop.xlane.xlu0 %1582
    %v1584 = vsel %vm98, %v1354, 0.0
    %1585 = vadd.xlane.f32.xlu0 %v1584
    %v1586 = vpop.xlane.xlu0 %1585
    %v1587 = vsel %vm98, %v1355, 0.0
    %1588 = vadd.xlane.f32.xlu0 %v1587
    %v1589 = vpop.xlane.xlu0 %1588
    %v1590 = vsel %vm98, %v1356, 0.0
    %1591 = vadd.xlane.f32.xlu0 %v1590
    %v1592 = vpop.xlane.xlu0 %1591
    %v1593 = vsel %vm98, %v1357, 0.0
    %1594 = vadd.xlane.f32.xlu0 %v1593
    %v1595 = vpop.xlane.xlu0 %1594
    %v1596 = vsel %vm98, %v1358, 0.0
    %1597 = vadd.xlane.f32.xlu0 %v1596
    %v1598 = vpop.xlane.xlu0 %1597
    %v1599 = vmul.f32 %v1361, 0.015625
    %v1600 = vmul.f32 %v1364, 0.015625
    %v1601 = vmul.f32 %v1367, 0.015625
    %v1602 = vmul.f32 %v1370, 0.015625
    %v1603 = vmul.f32 %v1373, 0.015625
    %v1604 = vmul.f32 %v1376, 0.015625
    %v1605 = vmul.f32 %v1379, 0.015625
    %v1606 = vmul.f32 %v1382, 0.015625
    %v1607 = vmul.f32 %v1385, 0.015625
    %v1608 = vmul.f32 %v1388, 0.015625
    %v1609 = vmul.f32 %v1391, 0.015625
    %v1610 = vmul.f32 %v1394, 0.015625
    %v1611 = vmul.f32 %v1397, 0.015625
    %v1612 = vmul.f32 %v1400, 0.015625
    %v1613 = vmul.f32 %v1403, 0.015625
    %v1614 = vmul.f32 %v1406, 0.015625
    %v1615 = vmul.f32 %v1409, 0.015625
    %v1616 = vmul.f32 %v1412, 0.015625
    %v1617 = vmul.f32 %v1415, 0.015625
    %v1618 = vmul.f32 %v1418, 0.015625
    %v1619 = vmul.f32 %v1421, 0.015625
    %v1620 = vmul.f32 %v1424, 0.015625
    %v1621 = vmul.f32 %v1427, 0.015625
    %v1622 = vmul.f32 %v1430, 0.015625
    %v1623 = vmul.f32 %v1433, 0.015625
    %v1624 = vmul.f32 %v1436, 0.015625
    %v1625 = vmul.f32 %v1439, 0.015625
    %v1626 = vmul.f32 %v1442, 0.015625
    %v1627 = vmul.f32 %v1445, 0.015625
    %v1628 = vmul.f32 %v1448, 0.015625
    %v1629 = vmul.f32 %v1451, 0.015625
    %v1630 = vmul.f32 %v1454, 0.015625
    %v1631 = vmul.f32 %v1457, 0.015625
    %v1632 = vmul.f32 %v1460, 0.015625
    %v1633 = vmul.f32 %v1463, 0.015625
    %v1634 = vmul.f32 %v1466, 0.015625
    %v1635 = vmul.f32 %v1469, 0.015625
    %v1636 = vmul.f32 %v1472, 0.015625
    %v1637 = vmul.f32 %v1475, 0.015625
    %v1638 = vmul.f32 %v1478, 0.015625
    %v1639 = vmul.f32 %v1481, 0.015625
    %v1640 = vmul.f32 %v1484, 0.015625
    %v1641 = vmul.f32 %v1487, 0.015625
    %v1642 = vmul.f32 %v1490, 0.015625
    %v1643 = vmul.f32 %v1493, 0.015625
    %v1644 = vmul.f32 %v1496, 0.015625
    %v1645 = vmul.f32 %v1499, 0.015625
    %v1646 = vmul.f32 %v1502, 0.015625
    %v1647 = vmul.f32 %v1505, 0.015625
    %v1648 = vmul.f32 %v1508, 0.015625
    %v1649 = vmul.f32 %v1511, 0.015625
    %v1650 = vmul.f32 %v1514, 0.015625
    %v1651 = vmul.f32 %v1517, 0.015625
    %v1652 = vmul.f32 %v1520, 0.015625
    %v1653 = vmul.f32 %v1523, 0.015625
    %v1654 = vmul.f32 %v1526, 0.015625
    %v1655 = vmul.f32 %v1529, 0.015625
    %v1656 = vmul.f32 %v1532, 0.015625
    %v1657 = vmul.f32 %v1535, 0.015625
    %v1658 = vmul.f32 %v1538, 0.015625
    %v1659 = vmul.f32 %v1541, 0.015625
    %v1660 = vmul.f32 %v1544, 0.015625
    %v1661 = vmul.f32 %v1547, 0.015625
    %v1662 = vmul.f32 %v1550, 0.015625
    %v1663 = vmul.f32 %v1553, 0.015625
    %v1664 = vmul.f32 %v1556, 0.015625
    %v1665 = vmul.f32 %v1559, 0.015625
    %v1666 = vmul.f32 %v1562, 0.015625
    %v1667 = vmul.f32 %v1565, 0.015625
    %v1668 = vmul.f32 %v1568, 0.015625
    %v1669 = vmul.f32 %v1571, 0.015625
    %v1670 = vmul.f32 %v1574, 0.015625
    %v1671 = vmul.f32 %v1577, 0.015625
    %v1672 = vmul.f32 %v1580, 0.015625
    %v1673 = vmul.f32 %v1583, 0.015625
    %v1674 = vmul.f32 %v1586, 0.015625
    %v1675 = vmul.f32 %v1589, 0.015625
    %v1676 = vmul.f32 %v1592, 0.015625
    %v1677 = vmul.f32 %v1595, 0.015625
    %v1678 = vmul.f32 %v1598, 0.015625
    %v1679 = vld [vmem:[%s10] sm:$0xff]
    %v1680 = vld [vmem:[%s10 + $0x8] sm:$0xff]
    %v1681 = vld [vmem:[%s10 + $0x10] sm:$0xff]
    %v1682 = vld [vmem:[%s10 + $0x18] sm:$0xff]
    %v1683 = vld [vmem:[%s10 + $0x20] sm:$0xff]
    %v1684 = vld [vmem:[%s10 + $0x28] sm:$0xff]
    %v1685 = vld [vmem:[%s10 + $0x30] sm:$0xff]
    %v1686 = vld [vmem:[%s10 + $0x38] sm:$0xff]
    %v1687 = vld [vmem:[%s10 + $0x40] sm:$0xff]
    %v1688 = vld [vmem:[%s10 + $0x48] sm:$0xff]
    %v1689 = vld [vmem:[%s10 + $0x50] sm:$0xff]
    %v1690 = vld [vmem:[%s10 + $0x58] sm:$0xff]
    %v1691 = vld [vmem:[%s10 + $0x60] sm:$0xff]
    %v1692 = vld [vmem:[%s10 + $0x68] sm:$0xff]
    %v1693 = vld [vmem:[%s10 + $0x70] sm:$0xff]
    %v1694 = vld [vmem:[%s10 + $0x78] sm:$0xff]
    %v1695 = vld [vmem:[%s10 + $0x80] sm:$0xff]
    %v1696 = vld [vmem:[%s10 + $0x88] sm:$0xff]
    %v1697 = vld [vmem:[%s10 + $0x90] sm:$0xff]
    %v1698 = vld [vmem:[%s10 + $0x98] sm:$0xff]
    %v1699 = vld [vmem:[%s10 + $0xa0] sm:$0xff]
    %v1700 = vld [vmem:[%s10 + $0xa8] sm:$0xff]
    %v1701 = vld [vmem:[%s10 + $0xb0] sm:$0xff]
    %v1702 = vld [vmem:[%s10 + $0xb8] sm:$0xff]
    %v1703 = vld [vmem:[%s10 + $0xc0] sm:$0xff]
    %v1704 = vld [vmem:[%s10 + $0xc8] sm:$0xff]
    %v1705 = vld [vmem:[%s10 + $0xd0] sm:$0xff]
    %v1706 = vld [vmem:[%s10 + $0xd8] sm:$0xff]
    %v1707 = vld [vmem:[%s10 + $0xe0] sm:$0xff]
    %v1708 = vld [vmem:[%s10 + $0xe8] sm:$0xff]
    %v1709 = vld [vmem:[%s10 + $0xf0] sm:$0xff]
    %v1710 = vld [vmem:[%s10 + $0xf8] sm:$0xff]
    %v1711 = vld [vmem:[%s10 + $0x100] sm:$0xff]
    %v1712 = vld [vmem:[%s10 + $0x108] sm:$0xff]
    %v1713 = vld [vmem:[%s10 + $0x110] sm:$0xff]
    %v1714 = vld [vmem:[%s10 + $0x118] sm:$0xff]
    %v1715 = vld [vmem:[%s10 + $0x120] sm:$0xff]
    %v1716 = vld [vmem:[%s10 + $0x128] sm:$0xff]
    %v1717 = vld [vmem:[%s10 + $0x130] sm:$0xff]
    %v1718 = vld [vmem:[%s10 + $0x138] sm:$0xff]
    %v1719 = vld [vmem:[%s11] sm:$0x1]
    %v1721 = vperm.slane %v1719, 0
    %v1803 = vperm.slane %v1599, %v324
    %v1804 = vperm.slane %v1600, %v326
    %v1805 = vsel %vm328, %v1804, %v1803
    %v1806 = vperm.slane %v1601, %v330
    %v1807 = vsel %vm332, %v1806, %v1805
    %v1808 = vperm.slane %v1602, %v334
    %v1809 = vsel %vm336, %v1808, %v1807
    %v1810 = vperm.slane %v1603, %v338
    %v1811 = vsel %vm340, %v1810, %v1809
    %v1812 = vperm.slane %v1604, %v342
    %v1813 = vsel %vm344, %v1812, %v1811
    %v1814 = vperm.slane %v1605, %v346
    %v1815 = vsel %vm348, %v1814, %v1813
    %v1816 = vperm.slane %v1606, %v350
    %v1817 = vsel %vm352, %v1816, %v1815
    %v1818 = vperm.slane %v1607, %v354
    %v1819 = vsel %vm356, %v1818, %v1817
    %v1820 = vperm.slane %v1608, %v358
    %v1821 = vsel %vm360, %v1820, %v1819
    %v1822 = vperm.slane %v1609, %v362
    %v1823 = vsel %vm364, %v1822, %v1821
    %v1824 = vperm.slane %v1610, %v366
    %v1825 = vsel %vm368, %v1824, %v1823
    %v1826 = vperm.slane %v1611, %v370
    %v1827 = vsel %vm372, %v1826, %v1825
    %v1828 = vperm.slane %v1612, %v374
    %v1829 = vsel %vm376, %v1828, %v1827
    %v1830 = vperm.slane %v1613, %v378
    %v1831 = vsel %vm380, %v1830, %v1829
    %v1832 = vperm.slane %v1614, %v382
    %v1833 = vsel %vm384, %v1832, %v1831
    %v1834 = vperm.slane %v1615, %v324
    %v1835 = vperm.slane %v1616, %v326
    %v1836 = vsel %vm328, %v1835, %v1834
    %v1837 = vperm.slane %v1617, %v330
    %v1838 = vsel %vm332, %v1837, %v1836
    %v1839 = vperm.slane %v1618, %v334
    %v1840 = vsel %vm336, %v1839, %v1838
    %v1841 = vperm.slane %v1619, %v338
    %v1842 = vsel %vm340, %v1841, %v1840
    %v1843 = vperm.slane %v1620, %v342
    %v1844 = vsel %vm344, %v1843, %v1842
    %v1845 = vperm.slane %v1621, %v346
    %v1846 = vsel %vm348, %v1845, %v1844
    %v1847 = vperm.slane %v1622, %v350
    %v1848 = vsel %vm352, %v1847, %v1846
    %v1849 = vperm.slane %v1623, %v354
    %v1850 = vsel %vm356, %v1849, %v1848
    %v1851 = vperm.slane %v1624, %v358
    %v1852 = vsel %vm360, %v1851, %v1850
    %v1853 = vperm.slane %v1625, %v362
    %v1854 = vsel %vm364, %v1853, %v1852
    %v1855 = vperm.slane %v1626, %v366
    %v1856 = vsel %vm368, %v1855, %v1854
    %v1857 = vperm.slane %v1627, %v370
    %v1858 = vsel %vm372, %v1857, %v1856
    %v1859 = vperm.slane %v1628, %v374
    %v1860 = vsel %vm376, %v1859, %v1858
    %v1861 = vperm.slane %v1629, %v378
    %v1862 = vsel %vm380, %v1861, %v1860
    %v1863 = vperm.slane %v1630, %v382
    %v1864 = vsel %vm384, %v1863, %v1862
    %v1865 = vperm.slane %v1631, %v324
    %v1866 = vperm.slane %v1632, %v326
    %v1867 = vsel %vm328, %v1866, %v1865
    %v1868 = vperm.slane %v1633, %v330
    %v1869 = vsel %vm332, %v1868, %v1867
    %v1870 = vperm.slane %v1634, %v334
    %v1871 = vsel %vm336, %v1870, %v1869
    %v1872 = vperm.slane %v1635, %v338
    %v1873 = vsel %vm340, %v1872, %v1871
    %v1874 = vperm.slane %v1636, %v342
    %v1875 = vsel %vm344, %v1874, %v1873
    %v1876 = vperm.slane %v1637, %v346
    %v1877 = vsel %vm348, %v1876, %v1875
    %v1878 = vperm.slane %v1638, %v350
    %v1879 = vsel %vm352, %v1878, %v1877
    %v1880 = vperm.slane %v1639, %v324
    %v1881 = vperm.slane %v1640, %v326
    %v1882 = vsel %vm328, %v1881, %v1880
    %v1883 = vperm.slane %v1641, %v330
    %v1884 = vsel %vm332, %v1883, %v1882
    %v1885 = vperm.slane %v1642, %v334
    %v1886 = vsel %vm336, %v1885, %v1884
    %v1887 = vperm.slane %v1643, %v338
    %v1888 = vsel %vm340, %v1887, %v1886
    %v1889 = vperm.slane %v1644, %v342
    %v1890 = vsel %vm344, %v1889, %v1888
    %v1891 = vperm.slane %v1645, %v346
    %v1892 = vsel %vm348, %v1891, %v1890
    %v1893 = vperm.slane %v1646, %v350
    %v1894 = vsel %vm352, %v1893, %v1892
    %v1895 = vperm.slane %v1647, %v354
    %v1896 = vsel %vm356, %v1895, %v1894
    %v1897 = vperm.slane %v1648, %v358
    %v1898 = vsel %vm360, %v1897, %v1896
    %v1899 = vperm.slane %v1649, %v362
    %v1900 = vsel %vm364, %v1899, %v1898
    %v1901 = vperm.slane %v1650, %v366
    %v1902 = vsel %vm368, %v1901, %v1900
    %v1903 = vperm.slane %v1651, %v370
    %v1904 = vsel %vm372, %v1903, %v1902
    %v1905 = vperm.slane %v1652, %v374
    %v1906 = vsel %vm376, %v1905, %v1904
    %v1907 = vperm.slane %v1653, %v378
    %v1908 = vsel %vm380, %v1907, %v1906
    %v1909 = vperm.slane %v1654, %v382
    %v1910 = vsel %vm384, %v1909, %v1908
    %v1911 = vperm.slane %v1655, %v324
    %v1912 = vperm.slane %v1656, %v326
    %v1913 = vsel %vm328, %v1912, %v1911
    %v1914 = vperm.slane %v1657, %v330
    %v1915 = vsel %vm332, %v1914, %v1913
    %v1916 = vperm.slane %v1658, %v334
    %v1917 = vsel %vm336, %v1916, %v1915
    %v1918 = vperm.slane %v1659, %v338
    %v1919 = vsel %vm340, %v1918, %v1917
    %v1920 = vperm.slane %v1660, %v342
    %v1921 = vsel %vm344, %v1920, %v1919
    %v1922 = vperm.slane %v1661, %v346
    %v1923 = vsel %vm348, %v1922, %v1921
    %v1924 = vperm.slane %v1662, %v350
    %v1925 = vsel %vm352, %v1924, %v1923
    %v1926 = vperm.slane %v1663, %v354
    %v1927 = vsel %vm356, %v1926, %v1925
    %v1928 = vperm.slane %v1664, %v358
    %v1929 = vsel %vm360, %v1928, %v1927
    %v1930 = vperm.slane %v1665, %v362
    %v1931 = vsel %vm364, %v1930, %v1929
    %v1932 = vperm.slane %v1666, %v366
    %v1933 = vsel %vm368, %v1932, %v1931
    %v1934 = vperm.slane %v1667, %v370
    %v1935 = vsel %vm372, %v1934, %v1933
    %v1936 = vperm.slane %v1668, %v374
    %v1937 = vsel %vm376, %v1936, %v1935
    %v1938 = vperm.slane %v1669, %v378
    %v1939 = vsel %vm380, %v1938, %v1937
    %v1940 = vperm.slane %v1670, %v382
    %v1941 = vsel %vm384, %v1940, %v1939
    %v1942 = vperm.slane %v1671, %v324
    %v1943 = vperm.slane %v1672, %v326
    %v1944 = vsel %vm328, %v1943, %v1942
    %v1945 = vperm.slane %v1673, %v330
    %v1946 = vsel %vm332, %v1945, %v1944
    %v1947 = vperm.slane %v1674, %v334
    %v1948 = vsel %vm336, %v1947, %v1946
    %v1949 = vperm.slane %v1675, %v338
    %v1950 = vsel %vm340, %v1949, %v1948
    %v1951 = vperm.slane %v1676, %v342
    %v1952 = vsel %vm344, %v1951, %v1950
    %v1953 = vperm.slane %v1677, %v346
    %v1954 = vsel %vm348, %v1953, %v1952
    %v1955 = vperm.slane %v1678, %v350
    %v1956 = vsel %vm352, %v1955, %v1954
    %v1957 = vsel %vm431, %v1910, %v1833
    %v1958 = vsel %vm431, %v1941, %v1864
    %v1959 = vsel %vm431, %v1956, %v1879
    %v1962 = vsel %vm98, %v1959, 0
    %1964 = vmatpush.msra.mxu0 %v1694
    %1965 = vmatpush.msra.mxu0 %v1693
    %1966 = vmatpush.msra.mxu0 %v1692
    %1967 = vmatpush.msra.mxu0 %v1691
    %1968 = vmatpush.msra.mxu0 %v1690
    %1969 = vmatpush.msra.mxu0 %v1689
    %1970 = vmatpush.msra.mxu0 %v1688
    %1971 = vmatpush.msra.mxu0 %v1687
    %1972 = vmatpush.msra.mxu0 %v1686
    %1973 = vmatpush.msra.mxu0 %v1685
    %1974 = vmatpush.msra.mxu0 %v1684
    %1975 = vmatpush.msra.mxu0 %v1683
    %1976 = vmatpush.msra.mxu0 %v1682
    %1977 = vmatpush.msra.mxu0 %v1681
    %1978 = vmatpush.msra.mxu0 %v1680
    %1979 = vmatpush.msra.mxu0 %v1679
    %1980 = vmatmul.f32.gmra.mxu0 %v1957
    %v1981 = vpop.f32.mrf.mxu0
    %v1982 = vadd.f32 %v1721, %v1981
    %1983 = vdwg.mxu0
    %1984 = vmatpush.msra.mxu0 %v1710
    %1985 = vmatpush.msra.mxu0 %v1709
    %1986 = vmatpush.msra.mxu0 %v1708
    %1987 = vmatpush.msra.mxu0 %v1707
    %1988 = vmatpush.msra.mxu0 %v1706
    %1989 = vmatpush.msra.mxu0 %v1705
    %1990 = vmatpush.msra.mxu0 %v1704
    %1991 = vmatpush.msra.mxu0 %v1703
    %1992 = vmatpush.msra.mxu0 %v1702
    %1993 = vmatpush.msra.mxu0 %v1701
    %1994 = vmatpush.msra.mxu0 %v1700
    %1995 = vmatpush.msra.mxu0 %v1699
    %1996 = vmatpush.msra.mxu0 %v1698
    %1997 = vmatpush.msra.mxu0 %v1697
    %1998 = vmatpush.msra.mxu0 %v1696
    %1999 = vmatpush.msra.mxu0 %v1695
    %2000 = vmatmul.f32.gmra.mxu0 %v1958
    %v2001 = vpop.f32.mrf.mxu0
    %v2002 = vadd.f32 %v1982, %v2001
    %2003 = vdwg.mxu0
    %2004 = vmatpush.msra.mxu0 0.0
    %2005 = vmatpush.msra.mxu0 0.0
    %2006 = vmatpush.msra.mxu0 0.0
    %2007 = vmatpush.msra.mxu0 0.0
    %2008 = vmatpush.msra.mxu0 0.0
    %2009 = vmatpush.msra.mxu0 0.0
    %2010 = vmatpush.msra.mxu0 0.0
    %2011 = vmatpush.msra.mxu0 0.0
    %2012 = vmatpush.msra.mxu0 %v1718
    %2013 = vmatpush.msra.mxu0 %v1717
    %2014 = vmatpush.msra.mxu0 %v1716
    %2015 = vmatpush.msra.mxu0 %v1715
    %2016 = vmatpush.msra.mxu0 %v1714
    %2017 = vmatpush.msra.mxu0 %v1713
    %2018 = vmatpush.msra.mxu0 %v1712
    %2019 = vmatpush.msra.mxu0 %v1711
    %2020 = vmatmul.f32.gmra.mxu0 %v1962
    %v2021 = vpop.f32.mrf.mxu0
    %v2022 = vadd.f32 %v2002, %v2021
    %2023 = vdwg.mxu0
    %v2024 = vmax.f32 %v2022, 0.0
    %v2025 = vld [vmem:[%s12 + $0x3] sm:$0x1]
    %v2027 = vperm.slane %v2025, 0
    %v2029 = vmul.f32 %v2024, %v2027
    %v2030 = vsel %vm484, %v2029, 0.0
    %2031 = vadd.xlane.f32.xlu0 %v2030
    %v2032 = vpop.xlane.xlu0 %2031
    %v2033 = vadd.f32 %v1278, %v2032
    %vm2034 = vcmask 1024
    %2035 = vst.msk [vmem:[%s14] sm:$0x3] %vm2034, %v2033
  $region61: #{tpu_custom_call.1} parent=0 // pred_fallthru
    _
  // Predicated region
  $region62: #{tpu_custom_call.1} parent=0 // pred_check
    _
  $region63: #{tpu_custom_call.1} parent=0 // pred_check_branch
    %2037 = sbr.rel (0) target = $region65
  $region64: #{tpu_custom_call.1} parent=0 // pred_region
    _
  $region65: #{tpu_custom_call.1} parent=0 // pred_fallthru
    _
  // Predicated region
  $region66: #{tpu_custom_call.1} parent=0 // pred_check
    _
  $region67: #{tpu_custom_call.1} parent=0 // pred_check_branch
    %2039 = sbr.rel (0) target = $region69
  $region68: #{tpu_custom_call.1} parent=0 // pred_region
    _
  $region69: #{tpu_custom_call.1} parent=0 // pred_fallthru
    _

</llo_original>
